<compile_context>
chip_gen: v6e
topology: v6e:2x2x1
jax: 0.10.0
libtpu: 0.0.40
codegen_flags: <defaults>
</compile_context>

<pallas_src>
import functools
import math

import jax
import jax.numpy as jnp
from jax.experimental import pallas as pl
from jax.experimental.pallas import tpu as pltpu


# Set False for an exact softmax divide (tighter numerics than the EUP approx).
_APPROX_SOFTMAX_RECIP = True

# Conservative per-step working-set budget: fits v5e's 16 MiB scoped-VMEM default
# (v6e/v7x default to 32 MiB).  Raise together with vmem_limit_bytes for big D.
_VMEM_BUDGET_BYTES = 12 * 1024 * 1024


# -----------------------------------------------------------------------------
# Row-tile chooser (VMEM-budget aware, prefers >= 2 parallel grid steps)
# -----------------------------------------------------------------------------

def _row_tile(m, d):
    def working_set(tm):
        x_blk = tm * d * 4                                    # f32 row block
        qkv_ws = (2 * (3 * x_blk + 3 * tm * d * 2)            # 3 in + stacked out (dbl buf)
                  + 2 * (3 * d * d * 2 + 3 * d * 4))          # stacked weights + biases
        fc_ws = (2 * (tm * d * 2 + 2 * x_blk)                 # ctx(bf16) + res + out
                 + 2 * (d * d * 2 + 3 * d * 4))               # fc weight + vecs
        return max(qkv_ws, fc_ws)

    cands = [t for t in (2048, 1024, 512, 256, 128, 64, 32, 16)
             if m % t == 0 and working_set(t) <= _VMEM_BUDGET_BYTES]
    for t in cands:                    # keep >= 2 steps so both v7x TCs get work
        if m // t >= 2:
            return t
    if cands:
        return cands[0]
    return m                           # tiny / odd m: one full block


# -----------------------------------------------------------------------------
# Kernel 1: fused Q/K/V projection  (stacked weights, stacked bf16 output)
# -----------------------------------------------------------------------------

def _qkv_proj_kernel(xq_ref, xk_ref, xv_ref, w_ref, b_ref, o_ref):
    bf16 = jnp.bfloat16
    f32 = jnp.float32
    for p, x_ref in enumerate((xq_ref, xk_ref, xv_ref)):
        y = jnp.dot(x_ref[...].astype(bf16), w_ref[p],
                    preferred_element_type=f32) + b_ref[p]
        o_ref[p] = y.astype(bf16)


def qkv_proj(xq2, xk2, xv2, params):
    """(M, D) f32 inputs -> stacked (3, M, D) bf16 projections [q, k, v]."""
    M, D = xq2.shape
    tm = _row_tile(M, D)
    assert M % tm == 0
    x_spec = pl.BlockSpec((tm, D), lambda i: (i, 0))
    cost = pl.CostEstimate(
        flops=int(6 * M * D * D),
        transcendentals=0,
        bytes_accessed=int(3 * M * D * 4 + 3 * D * D * 2 + 3 * D * 4 + 3 * M * D * 2))
    return pl.pallas_call(
        _qkv_proj_kernel,
        out_shape=jax.ShapeDtypeStruct((3, M, D), jnp.bfloat16),
        grid=(M // tm,),
        in_specs=[x_spec, x_spec, x_spec,
                  pl.BlockSpec((3, D, D), lambda i: (0, 0, 0)),
                  pl.BlockSpec((3, 1, D), lambda i: (0, 0, 0))],
        out_specs=pl.BlockSpec((3, tm, D), lambda i: (0, i, 0)),
        compiler_params=pltpu.CompilerParams(dimension_semantics=("parallel",)),
        cost_estimate=cost,
    )(xq2, xk2, xv2, params["w_qkv"], params["b_qkv"])


# -----------------------------------------------------------------------------
# Kernel 2: attention — one (batch, head) group per grid step
# -----------------------------------------------------------------------------

def _attention_kernel(qkv_ref, mask_ref, o_ref):
    # qkv_ref: (3, 1, 1, S, d_k) bf16; mask_ref: (1, S, S) bf16 (1.0 = masked).
    f32 = jnp.float32
    q = qkv_ref[0, 0, 0]                          # (S, d_k) bf16
    k = qkv_ref[1, 0, 0]
    v = qkv_ref[2, 0, 0]
    d_k = q.shape[-1]

    # scores = q @ k^T / sqrt(d_k): MXU with f32 accumulation, no transpose copy.
    s = jax.lax.dot_general(q, k, (((1,), (1,)), ((), ())),
                            preferred_element_type=f32)
    s = s * (1.0 / math.sqrt(d_k))

    # masked_fill(-inf) -> finite -1e30 (identical softmax result).
    s = jnp.where(mask_ref[0] != 0, jnp.float32(-1e30), s)

    # softmax over keys; dropout on the probabilities = identity (eval mode).
    s = s - jnp.max(s, axis=-1, keepdims=True)
    e = jnp.exp(s)
    denom = jnp.sum(e, axis=-1, keepdims=True)
    if _APPROX_SOFTMAX_RECIP:
        p = e * pl.reciprocal(denom, approx=True)
    else:
        p = e / denom

    o_ref[0, 0] = jnp.dot(p.astype(jnp.bfloat16), v,
                          preferred_element_type=f32).astype(o_ref.dtype)


def attention_heads(qkvh, mask_b16):
    """qkvh: (3, B, H, S, d_k) bf16; mask_b16: (B, S, S) bf16 -> (B, H, S, d_k) bf16."""
    _, B, H, S, d_k = qkvh.shape
    qkv_spec = pl.BlockSpec((3, 1, 1, S, d_k), lambda b, h: (0, b, h, 0, 0))
    # Reproduces attention_mask.repeat(num_head, 1, 1): group g = b*H + h uses
    # mask[g % B] — expressed purely in the index_map (O(S^2) mask DMA per step).
    mask_spec = pl.BlockSpec((1, S, S), lambda b, h: ((b * H + h) % B, 0, 0))
    out_spec = pl.BlockSpec((1, 1, S, d_k), lambda b, h: (b, h, 0, 0))
    cost = pl.CostEstimate(
        flops=int(4 * B * H * S * S * d_k + 6 * B * H * S * S),
        transcendentals=int(B * H * S * S),
        bytes_accessed=int(4 * B * H * S * d_k * 2 + B * H * S * S * 2))
    # TODO(synk): flash-style query tiling (running max/sum scratch) for large S.
    return pl.pallas_call(
        _attention_kernel,
        out_shape=jax.ShapeDtypeStruct((B, H, S, d_k), jnp.bfloat16),
        grid=(B, H),
        in_specs=[qkv_spec, mask_spec],
        out_specs=out_spec,
        compiler_params=pltpu.CompilerParams(
            dimension_semantics=("parallel", "parallel")),
        cost_estimate=cost,
    )(qkvh, mask_b16)


# -----------------------------------------------------------------------------
# Kernel 3: fc + residual + LayerNorm fused epilogue
# -----------------------------------------------------------------------------

def _fc_add_ln_kernel(ctx_ref, res_ref, w_ref, vec_ref, o_ref):
    # y = LayerNorm(residual + dropout(fc(context))), eps=1e-6, dropout=identity.
    # vec_ref rows: [fc bias, LN gamma, LN beta]   (each (1, D) f32)
    f32 = jnp.float32
    y = jnp.dot(ctx_ref[...], w_ref[...], preferred_element_type=f32) + vec_ref[0]
    y = res_ref[...] + y
    mean = jnp.mean(y, axis=-1, keepdims=True)
    c = y - mean
    var = jnp.mean(c * c, axis=-1, keepdims=True)
    o_ref[...] = c * jax.lax.rsqrt(var + 1e-6) * vec_ref[1] + vec_ref[2]


def fc_add_layernorm(ctx2, res2, params):
    M, D = ctx2.shape
    tm = _row_tile(M, D)
    assert M % tm == 0
    blk_spec = pl.BlockSpec((tm, D), lambda i: (i, 0))
    cost = pl.CostEstimate(
        flops=int(2 * M * D * D + 10 * M * D),
        transcendentals=int(M),
        bytes_accessed=int(M * D * 2 + M * D * 4 + D * D * 2 + 3 * D * 4 + M * D * 4))
    return pl.pallas_call(
        _fc_add_ln_kernel,
        out_shape=jax.ShapeDtypeStruct((M, D), jnp.float32),
        grid=(M // tm,),
        in_specs=[blk_spec, blk_spec,
                  pl.BlockSpec((D, D), lambda i: (0, 0)),
                  pl.BlockSpec((3, 1, D), lambda i: (0, 0, 0))],
        out_specs=blk_spec,
        compiler_params=pltpu.CompilerParams(dimension_semantics=("parallel",)),
        cost_estimate=cost,
    )(ctx2, res2, params["w_fc"], params["fc_ln_vecs"])


# -----------------------------------------------------------------------------
# MultiHeadAttention forward (glue: free reshapes, bf16 mask, param bookkeeping)
# -----------------------------------------------------------------------------

def multi_head_attention(xq, xk, xv, attention_mask, params, num_head):
    B, S, D = xq.shape
    H = num_head
    assert D % H == 0
    d_k = D // H
    M = B * S

    xq2 = xq.reshape(M, D)
    xk2 = xk.reshape(M, D)
    xv2 = xv.reshape(M, D)

    # 1) fused Q/K/V projection -> stacked bf16 (3, M, D).
    qkv = qkv_proj(xq2, xk2, xv2, params)

    # Reproduce q.view(batch*num_head, -1, d_k): raw row-major reshape, regrouped
    # as (B, H, S, d_k).  A pure bitcast wrapper-side (no data movement).
    qkvh = qkv.reshape(3, B, H, S, d_k)

    # Mask stays boolean-sized: bf16 0/1, converted to -1e30 inside the kernel.
    if attention_mask is None:
        mask_b16 = jnp.zeros((B, S, S), jnp.bfloat16)
    else:
        mask_b16 = attention_mask.astype(jnp.bfloat16)

    # 2) attention, one (batch, head) group per grid step.
    ctx = attention_heads(qkvh, mask_b16)                 # (B, H, S, d_k) bf16

    # context.contiguous().view(batch, -1, h_size) == raw reshape back to (M, D).
    ctx2 = ctx.reshape(M, D)

    # 3) fc + residual + LayerNorm fused.
    out = fc_add_layernorm(ctx2, xq2, params)
    return out.reshape(B, S, D)


# -----------------------------------------------------------------------------
# Pure-JAX reference (mirrors the PyTorch forward) and parameter init
# -----------------------------------------------------------------------------

def mha_reference(xq, xk, xv, attention_mask, params, num_head):
    B, S, D = xq.shape
    H = num_head
    d_k = D // H
    f32 = jnp.float32

    w_qkv = params["w_qkv"].astype(f32)                   # (3, D, D)
    b_qkv = params["b_qkv"]                               # (3, 1, D)
    residual = xq.reshape(-1, D)
    q = (xq.reshape(-1, D) @ w_qkv[0] + b_qkv[0]).reshape(B * H, S, d_k)
    k = (xk.reshape(-1, D) @ w_qkv[1] + b_qkv[1]).reshape(B * H, S, d_k)
    v = (xv.reshape(-1, D) @ w_qkv[2] + b_qkv[2]).reshape(B * H, S, d_k)
    scores = jnp.einsum("gqd,gkd->gqk", q, k) / jnp.sqrt(jnp.float32(d_k))
    if attention_mask is not None:
        m = jnp.tile(attention_mask, (H, 1, 1))
        scores = jnp.where(m, -1e30, scores)
    p = jax.nn.softmax(scores, axis=-1)
    ctx = jnp.einsum("gqk,gkd->gqd", p, v).reshape(-1, D)
    b_fc, ln_g, ln_b = (params["fc_ln_vecs"][0], params["fc_ln_vecs"][1],
                        params["fc_ln_vecs"][2])
    out = ctx @ params["w_fc"].astype(f32) + b_fc
    out = residual + out
    mean = out.mean(-1, keepdims=True)
    var = ((out - mean) ** 2).mean(-1, keepdims=True)
    out = (out - mean) / jnp.sqrt(var + 1e-6) * ln_g + ln_b
    return out.reshape(B, S, D)


def init_mha_params(key, model_dim):
    k_qkv_w, k_qkv_b, k_fc_w, k_fc_b = jax.random.split(key, 4)
    # Weights stored bf16 (MXU inputs, halved weight DMA); biases / LN stay f32.
    w_qkv = (jax.random.normal(k_qkv_w, (3, model_dim, model_dim), jnp.float32)
             * 0.1).astype(jnp.bfloat16)
    b_qkv = jax.random.normal(k_qkv_b, (3, 1, model_dim), jnp.float32) * 0.1
    w_fc = (jax.random.normal(k_fc_w, (model_dim, model_dim), jnp.float32)
            * 0.1).astype(jnp.bfloat16)
    b_fc = jax.random.normal(k_fc_b, (1, 1, model_dim), jnp.float32) * 0.1
    fc_ln_vecs = jnp.concatenate(
        [b_fc,
         jnp.ones((1, 1, model_dim), jnp.float32),     # LN gamma
         jnp.zeros((1, 1, model_dim), jnp.float32)],   # LN beta
        axis=0)                                        # (3, 1, D)
    return dict(w_qkv=w_qkv, b_qkv=b_qkv, w_fc=w_fc, fc_ln_vecs=fc_ln_vecs)


# -----------------------------------------------------------------------------
# Main
# -----------------------------------------------------------------------------

if __name__ == "__main__":
    batch, seq, model_dim, num_head = 2, 16, 32, 4

    key = jax.random.PRNGKey(0)
    k_param, k_x = jax.random.split(key)

    params = init_mha_params(k_param, model_dim)
    x = jax.random.normal(k_x, (batch, seq, model_dim), jnp.float32)

    # Boolean padding-style mask: mask out attention to the last key position.
    attention_mask = jnp.zeros((batch, seq, seq), dtype=bool).at[:, :, -1].set(True)

    fwd = jax.jit(functools.partial(multi_head_attention, num_head=num_head))
    out = jax.block_until_ready(fwd(x, x, x, attention_mask, params))

    ref = mha_reference(x, x, x, attention_mask, params, num_head)

    assert out.shape == (batch, seq, model_dim)
    assert bool(jnp.all(jnp.isfinite(out)))
    assert bool(jnp.allclose(out, ref, atol=1e-1, rtol=1e-1))
    print("KERNEL_OK")
</pallas_src>

<mosaic_0001>
module attributes {stable_mosaic.version = 11 : i64} {
  func.func @_qkv_proj_kernel(%arg0: i32, %arg1: memref<16x32xf32, #tpu.memory_space<vmem>>, %arg2: memref<16x32xf32, #tpu.memory_space<vmem>>, %arg3: memref<16x32xf32, #tpu.memory_space<vmem>>, %arg4: memref<3x32x32xbf16, #tpu.memory_space<vmem>>, %arg5: memref<3x1x32xf32, #tpu.memory_space<vmem>>, %arg6: memref<3x16x32xbf16, #tpu.memory_space<vmem>>) attributes {dimension_semantics = [#tpu.dimension_semantics<parallel>], iteration_bounds = array<i64: 2>, scalar_prefetch = 0 : i64, scratch_operands = 0 : i64, tpu.core_type = #tpu.core_type<tc>, window_params = [{transform_indices = @transform_0, window_bounds = array<i64: 16, 32>}, {transform_indices = @transform_1, window_bounds = array<i64: 16, 32>}, {transform_indices = @transform_2, window_bounds = array<i64: 16, 32>}, {pipeline_mode = #tpu.pipeline_mode<synchronous>, transform_indices = @transform_3, window_bounds = array<i64: 3, 32, 32>}, {pipeline_mode = #tpu.pipeline_mode<synchronous>, transform_indices = @transform_4, window_bounds = array<i64: 3, 1, 32>}, {transform_indices = @transform_5, window_bounds = array<i64: 3, 16, 32>}]} {
    %c0 = arith.constant 0 : index
    %c0_0 = arith.constant 0 : index
    %0 = vector.load %arg1[%c0, %c0_0] : memref<16x32xf32, #tpu.memory_space<vmem>>, vector<16x32xf32>
    %1 = arith.truncf %0 : vector<16x32xf32> to vector<16x32xbf16>
    %c0_1 = arith.constant 0 : index
    %c0_2 = arith.constant 0 : index
    %c0_3 = arith.constant 0 : index
    %2 = vector.load %arg4[%c0_1, %c0_2, %c0_3] : memref<3x32x32xbf16, #tpu.memory_space<vmem>>, vector<1x32x32xbf16>
    %3 = vector.shape_cast %2 : vector<1x32x32xbf16> to vector<32x32xbf16>
    %cst = arith.constant dense<0.000000e+00> : vector<16x32xf32>
    %4 = tpu.matmul %1, %3, %cst {dimension_numbers = #tpu.dot_dimension_numbers<[1], [0], [0], [1], [0, 0, 1, 1], [], []>} : vector<16x32xbf16>, vector<32x32xbf16>, vector<16x32xf32> -> vector<16x32xf32>
    %c0_4 = arith.constant 0 : index
    %c0_5 = arith.constant 0 : index
    %c0_6 = arith.constant 0 : index
    %5 = vector.load %arg5[%c0_4, %c0_5, %c0_6] : memref<3x1x32xf32, #tpu.memory_space<vmem>>, vector<1x1x32xf32>
    %6 = vector.shape_cast %5 : vector<1x1x32xf32> to vector<1x32xf32>
    %7 = vector.broadcast %6 : vector<1x32xf32> to vector<16x32xf32>
    %8 = arith.addf %4, %7 : vector<16x32xf32>
    %9 = arith.truncf %8 : vector<16x32xf32> to vector<16x32xbf16>
    %c0_7 = arith.constant 0 : index
    %c0_8 = arith.constant 0 : index
    %c0_9 = arith.constant 0 : index
    %10 = vector.load %arg6[%c0_7, %c0_8, %c0_9] : memref<3x16x32xbf16, #tpu.memory_space<vmem>>, vector<1x16x32xbf16>
    %11 = vector.shape_cast %10 : vector<1x16x32xbf16> to vector<16x32xbf16>
    %12 = vector.shape_cast %9 : vector<16x32xbf16> to vector<1x16x32xbf16>
    tpu.vector_store %arg6[%c0_7, %c0_8, %c0_9], %12 {strides = array<i32>} : memref<3x16x32xbf16, #tpu.memory_space<vmem>>, vector<1x16x32xbf16>,
    %c0_10 = arith.constant 0 : index
    %c0_11 = arith.constant 0 : index
    %13 = vector.load %arg2[%c0_10, %c0_11] : memref<16x32xf32, #tpu.memory_space<vmem>>, vector<16x32xf32>
    %14 = arith.truncf %13 : vector<16x32xf32> to vector<16x32xbf16>
    %c1 = arith.constant 1 : index
    %c0_12 = arith.constant 0 : index
    %c0_13 = arith.constant 0 : index
    %15 = vector.load %arg4[%c1, %c0_12, %c0_13] : memref<3x32x32xbf16, #tpu.memory_space<vmem>>, vector<1x32x32xbf16>
    %16 = vector.shape_cast %15 : vector<1x32x32xbf16> to vector<32x32xbf16>
    %cst_14 = arith.constant dense<0.000000e+00> : vector<16x32xf32>
    %17 = tpu.matmul %14, %16, %cst_14 {dimension_numbers = #tpu.dot_dimension_numbers<[1], [0], [0], [1], [0, 0, 1, 1], [], []>} : vector<16x32xbf16>, vector<32x32xbf16>, vector<16x32xf32> -> vector<16x32xf32>
    %c1_15 = arith.constant 1 : index
    %c0_16 = arith.constant 0 : index
    %c0_17 = arith.constant 0 : index
    %18 = vector.load %arg5[%c1_15, %c0_16, %c0_17] : memref<3x1x32xf32, #tpu.memory_space<vmem>>, vector<1x1x32xf32>
    %19 = vector.shape_cast %18 : vector<1x1x32xf32> to vector<1x32xf32>
    %20 = vector.broadcast %19 : vector<1x32xf32> to vector<16x32xf32>
    %21 = arith.addf %17, %20 : vector<16x32xf32>
    %22 = arith.truncf %21 : vector<16x32xf32> to vector<16x32xbf16>
    %c1_18 = arith.constant 1 : index
    %c0_19 = arith.constant 0 : index
    %c0_20 = arith.constant 0 : index
    %23 = vector.load %arg6[%c1_18, %c0_19, %c0_20] : memref<3x16x32xbf16, #tpu.memory_space<vmem>>, vector<1x16x32xbf16>
    %24 = vector.shape_cast %23 : vector<1x16x32xbf16> to vector<16x32xbf16>
    %25 = vector.shape_cast %22 : vector<16x32xbf16> to vector<1x16x32xbf16>
    tpu.vector_store %arg6[%c1_18, %c0_19, %c0_20], %25 {strides = array<i32>} : memref<3x16x32xbf16, #tpu.memory_space<vmem>>, vector<1x16x32xbf16>,
    %c0_21 = arith.constant 0 : index
    %c0_22 = arith.constant 0 : index
    %26 = vector.load %arg3[%c0_21, %c0_22] : memref<16x32xf32, #tpu.memory_space<vmem>>, vector<16x32xf32>
    %27 = arith.truncf %26 : vector<16x32xf32> to vector<16x32xbf16>
    %c2 = arith.constant 2 : index
    %c0_23 = arith.constant 0 : index
    %c0_24 = arith.constant 0 : index
    %28 = vector.load %arg4[%c2, %c0_23, %c0_24] : memref<3x32x32xbf16, #tpu.memory_space<vmem>>, vector<1x32x32xbf16>
    %29 = vector.shape_cast %28 : vector<1x32x32xbf16> to vector<32x32xbf16>
    %cst_25 = arith.constant dense<0.000000e+00> : vector<16x32xf32>
    %30 = tpu.matmul %27, %29, %cst_25 {dimension_numbers = #tpu.dot_dimension_numbers<[1], [0], [0], [1], [0, 0, 1, 1], [], []>} : vector<16x32xbf16>, vector<32x32xbf16>, vector<16x32xf32> -> vector<16x32xf32>
    %c2_26 = arith.constant 2 : index
    %c0_27 = arith.constant 0 : index
    %c0_28 = arith.constant 0 : index
    %31 = vector.load %arg5[%c2_26, %c0_27, %c0_28] : memref<3x1x32xf32, #tpu.memory_space<vmem>>, vector<1x1x32xf32>
    %32 = vector.shape_cast %31 : vector<1x1x32xf32> to vector<1x32xf32>
    %33 = vector.broadcast %32 : vector<1x32xf32> to vector<16x32xf32>
    %34 = arith.addf %30, %33 : vector<16x32xf32>
    %35 = arith.truncf %34 : vector<16x32xf32> to vector<16x32xbf16>
    %c2_29 = arith.constant 2 : index
    %c0_30 = arith.constant 0 : index
    %c0_31 = arith.constant 0 : index
    %36 = vector.load %arg6[%c2_29, %c0_30, %c0_31] : memref<3x16x32xbf16, #tpu.memory_space<vmem>>, vector<1x16x32xbf16>
    %37 = vector.shape_cast %36 : vector<1x16x32xbf16> to vector<16x32xbf16>
    %38 = vector.shape_cast %35 : vector<16x32xbf16> to vector<1x16x32xbf16>
    tpu.vector_store %arg6[%c2_29, %c0_30, %c0_31], %38 {strides = array<i32>} : memref<3x16x32xbf16, #tpu.memory_space<vmem>>, vector<1x16x32xbf16>,
    return
  }
  func.func @transform_0(%arg0: i32) -> (i32, i32) {
    %c0_i32 = arith.constant 0 : i32
    %c0_i32_0 = arith.constant 0 : i32
    return %arg0, %c0_i32 : i32, i32
  }
  func.func @transform_1(%arg0: i32) -> (i32, i32) {
    %c0_i32 = arith.constant 0 : i32
    %c0_i32_0 = arith.constant 0 : i32
    return %arg0, %c0_i32 : i32, i32
  }
  func.func @transform_2(%arg0: i32) -> (i32, i32) {
    %c0_i32 = arith.constant 0 : i32
    %c0_i32_0 = arith.constant 0 : i32
    return %arg0, %c0_i32 : i32, i32
  }
  func.func @transform_3(%arg0: i32) -> (i32, i32, i32) {
    %c0_i32 = arith.constant 0 : i32
    %c0_i32_0 = arith.constant 0 : i32
    %c0_i32_1 = arith.constant 0 : i32
    %c0_i32_2 = arith.constant 0 : i32
    return %c0_i32, %c0_i32_0, %c0_i32_1 : i32, i32, i32
  }
  func.func @transform_4(%arg0: i32) -> (i32, i32, i32) {
    %c0_i32 = arith.constant 0 : i32
    %c0_i32_0 = arith.constant 0 : i32
    %c0_i32_1 = arith.constant 0 : i32
    %c0_i32_2 = arith.constant 0 : i32
    return %c0_i32, %c0_i32_0, %c0_i32_1 : i32, i32, i32
  }
  func.func @transform_5(%arg0: i32) -> (i32, i32, i32) {
    %c0_i32 = arith.constant 0 : i32
    %c0_i32_0 = arith.constant 0 : i32
    %c0_i32_1 = arith.constant 0 : i32
    return %c0_i32, %arg0, %c0_i32_0 : i32, i32, i32
  }
}

module attributes {stable_mosaic.version = 11 : i64} {
  func.func @_attention_kernel(%arg0: i32, %arg1: i32, %arg2: memref<3x1x1x16x8xbf16, #tpu.memory_space<vmem>>, %arg3: memref<1x16x16xbf16, #tpu.memory_space<vmem>>, %arg4: memref<1x1x16x8xbf16, #tpu.memory_space<vmem>>) attributes {dimension_semantics = [#tpu.dimension_semantics<parallel>, #tpu.dimension_semantics<parallel>], iteration_bounds = array<i64: 2, 4>, scalar_prefetch = 0 : i64, scratch_operands = 0 : i64, tpu.core_type = #tpu.core_type<tc>, window_params = [{transform_indices = @transform_0, window_bounds = array<i64: 3, 1, 1, 16, 8>}, {transform_indices = @transform_1, window_bounds = array<i64: 1, 16, 16>}, {transform_indices = @transform_2, window_bounds = array<i64: 1, 1, 16, 8>}]} {
    %c0 = arith.constant 0 : index
    %c0_0 = arith.constant 0 : index
    %c0_1 = arith.constant 0 : index
    %c0_2 = arith.constant 0 : index
    %c0_3 = arith.constant 0 : index
    %0 = vector.load %arg2[%c0, %c0_0, %c0_1, %c0_2, %c0_3] : memref<3x1x1x16x8xbf16, #tpu.memory_space<vmem>>, vector<1x1x1x16x8xbf16>
    %1 = vector.shape_cast %0 : vector<1x1x1x16x8xbf16> to vector<16x8xbf16>
    %c1 = arith.constant 1 : index
    %c0_4 = arith.constant 0 : index
    %c0_5 = arith.constant 0 : index
    %c0_6 = arith.constant 0 : index
    %c0_7 = arith.constant 0 : index
    %2 = vector.load %arg2[%c1, %c0_4, %c0_5, %c0_6, %c0_7] : memref<3x1x1x16x8xbf16, #tpu.memory_space<vmem>>, vector<1x1x1x16x8xbf16>
    %3 = vector.shape_cast %2 : vector<1x1x1x16x8xbf16> to vector<16x8xbf16>
    %c2 = arith.constant 2 : index
    %c0_8 = arith.constant 0 : index
    %c0_9 = arith.constant 0 : index
    %c0_10 = arith.constant 0 : index
    %c0_11 = arith.constant 0 : index
    %4 = vector.load %arg2[%c2, %c0_8, %c0_9, %c0_10, %c0_11] : memref<3x1x1x16x8xbf16, #tpu.memory_space<vmem>>, vector<1x1x1x16x8xbf16>
    %5 = vector.shape_cast %4 : vector<1x1x1x16x8xbf16> to vector<16x8xbf16>
    %cst = arith.constant dense<0.000000e+00> : vector<16x16xf32>
    %6 = tpu.matmul %1, %3, %cst {dimension_numbers = #tpu.dot_dimension_numbers<[1], [1], [0], [0], [0, 0, 1, 0], [], []>} : vector<16x8xbf16>, vector<16x8xbf16>, vector<16x16xf32> -> vector<16x16xf32>
    %cst_12 = arith.constant 0.353553385 : f32
    %7 = vector.broadcast %cst_12 : f32 to vector<16x16xf32>
    %8 = arith.mulf %6, %7 : vector<16x16xf32>
    %c0_13 = arith.constant 0 : index
    %c0_14 = arith.constant 0 : index
    %c0_15 = arith.constant 0 : index
    %9 = vector.load %arg3[%c0_13, %c0_14, %c0_15] : memref<1x16x16xbf16, #tpu.memory_space<vmem>>, vector<1x16x16xbf16>
    %10 = vector.shape_cast %9 : vector<1x16x16xbf16> to vector<16x16xbf16>
    %cst_16 = arith.constant 0.000000e+00 : bf16
    %11 = vector.broadcast %cst_16 : bf16 to vector<16x16xbf16>
    %12 = arith.cmpf one, %10, %11 : vector<16x16xbf16>
    %cst_17 = arith.constant -1.000000e+30 : f32
    %13 = vector.broadcast %cst_17 : f32 to vector<16x16xf32>
    %14 = arith.select %12, %13, %8 : vector<16x16xi1>, vector<16x16xf32>
    %cst_18 = arith.constant dense<0xFF800000> : vector<16xf32>
    %15 = vector.multi_reduction <maximumf>, %14, %cst_18 [1] : vector<16x16xf32> to vector<16xf32>
    %16 = vector.shape_cast %15 : vector<16xf32> to vector<16x1xf32>
    %17 = vector.broadcast %16 : vector<16x1xf32> to vector<16x16xf32>
    %18 = arith.subf %14, %17 : vector<16x16xf32>
    %19 = math.exp %18 : vector<16x16xf32>
    %cst_19 = arith.constant dense<0.000000e+00> : vector<16xf32>
    %20 = vector.multi_reduction <add>, %19, %cst_19 [1] : vector<16x16xf32> to vector<16xf32>
    %21 = vector.shape_cast %20 : vector<16xf32> to vector<16x1xf32>
    %22 = tpu.reciprocal %21 {approx = true} : vector<16x1xf32> -> vector<16x1xf32>
    %23 = vector.broadcast %22 : vector<16x1xf32> to vector<16x16xf32>
    %24 = arith.mulf %19, %23 : vector<16x16xf32>
    %25 = arith.truncf %24 : vector<16x16xf32> to vector<16x16xbf16>
    %cst_20 = arith.constant dense<0.000000e+00> : vector<16x8xf32>
    %26 = tpu.matmul %25, %5, %cst_20 {dimension_numbers = #tpu.dot_dimension_numbers<[1], [0], [0], [1], [0, 0, 1, 1], [], []>} : vector<16x16xbf16>, vector<16x8xbf16>, vector<16x8xf32> -> vector<16x8xf32>
    %27 = arith.truncf %26 : vector<16x8xf32> to vector<16x8xbf16>
    %c0_21 = arith.constant 0 : index
    %c0_22 = arith.constant 0 : index
    %c0_23 = arith.constant 0 : index
    %c0_24 = arith.constant 0 : index
    %28 = vector.load %arg4[%c0_21, %c0_22, %c0_23, %c0_24] : memref<1x1x16x8xbf16, #tpu.memory_space<vmem>>, vector<1x1x16x8xbf16>
    %29 = vector.shape_cast %28 : vector<1x1x16x8xbf16> to vector<16x8xbf16>
    %30 = vector.shape_cast %27 : vector<16x8xbf16> to vector<1x1x16x8xbf16>
    tpu.vector_store %arg4[%c0_21, %c0_22, %c0_23, %c0_24], %30 {strides = array<i32>} : memref<1x1x16x8xbf16, #tpu.memory_space<vmem>>, vector<1x1x16x8xbf16>,
    return
  }
  func.func @transform_0(%arg0: i32, %arg1: i32) -> (i32, i32, i32, i32, i32) {
    %c0_i32 = arith.constant 0 : i32
    %c0_i32_0 = arith.constant 0 : i32
    %c0_i32_1 = arith.constant 0 : i32
    %c0_i32_2 = arith.constant 0 : i32
    return %c0_i32, %arg0, %arg1, %c0_i32_0, %c0_i32_1 : i32, i32, i32, i32, i32
  }
  func.func @transform_1(%arg0: i32, %arg1: i32) -> (i32, i32, i32) {
    %c4_i32 = arith.constant 4 : i32
    %0 = arith.muli %arg0, %c4_i32 : i32
    %1 = arith.addi %0, %arg1 : i32
    %c2_i32 = arith.constant 2 : i32
    %c0_i32 = arith.constant 0 : i32
    %2 = arith.cmpi eq, %c2_i32, %c0_i32 : i32
    %c1_i32 = arith.constant 1 : i32
    %3 = arith.select %2, %c1_i32, %c2_i32 : i32
    %4 = arith.remsi %1, %3 : i32
    %c0_i32_0 = arith.constant 0 : i32
    %5 = arith.cmpi ne, %4, %c0_i32_0 : i32
    %c0_i32_1 = arith.constant 0 : i32
    %6 = arith.cmpi slt, %4, %c0_i32_1 : i32
    %c0_i32_2 = arith.constant 0 : i32
    %7 = arith.cmpi slt, %3, %c0_i32_2 : i32
    %8 = arith.xori %6, %7 : i1
    %9 = arith.andi %8, %5 : i1
    %10 = arith.addi %4, %3 : i32
    %11 = arith.select %9, %10, %4 : i32
    %c0_i32_3 = arith.constant 0 : i32
    %c0_i32_4 = arith.constant 0 : i32
    %c0_i32_5 = arith.constant 0 : i32
    return %11, %c0_i32_3, %c0_i32_4 : i32, i32, i32
  }
  func.func @transform_2(%arg0: i32, %arg1: i32) -> (i32, i32, i32, i32) {
    %c0_i32 = arith.constant 0 : i32
    %c0_i32_0 = arith.constant 0 : i32
    %c0_i32_1 = arith.constant 0 : i32
    return %arg0, %arg1, %c0_i32, %c0_i32_0 : i32, i32, i32, i32
  }
}

module attributes {stable_mosaic.version = 11 : i64} {
  func.func @_fc_add_ln_kernel(%arg0: i32, %arg1: memref<16x32xbf16, #tpu.memory_space<vmem>>, %arg2: memref<16x32xf32, #tpu.memory_space<vmem>>, %arg3: memref<32x32xbf16, #tpu.memory_space<vmem>>, %arg4: memref<3x1x32xf32, #tpu.memory_space<vmem>>, %arg5: memref<16x32xf32, #tpu.memory_space<vmem>>) attributes {dimension_semantics = [#tpu.dimension_semantics<parallel>], iteration_bounds = array<i64: 2>, scalar_prefetch = 0 : i64, scratch_operands = 0 : i64, tpu.core_type = #tpu.core_type<tc>, window_params = [{transform_indices = @transform_0, window_bounds = array<i64: 16, 32>}, {transform_indices = @transform_1, window_bounds = array<i64: 16, 32>}, {pipeline_mode = #tpu.pipeline_mode<synchronous>, transform_indices = @transform_2, window_bounds = array<i64: 32, 32>}, {pipeline_mode = #tpu.pipeline_mode<synchronous>, transform_indices = @transform_3, window_bounds = array<i64: 3, 1, 32>}, {transform_indices = @transform_4, window_bounds = array<i64: 16, 32>}]} {
    %c0 = arith.constant 0 : index
    %c0_0 = arith.constant 0 : index
    %0 = vector.load %arg1[%c0, %c0_0] : memref<16x32xbf16, #tpu.memory_space<vmem>>, vector<16x32xbf16>
    %c0_1 = arith.constant 0 : index
    %c0_2 = arith.constant 0 : index
    %1 = vector.load %arg3[%c0_1, %c0_2] : memref<32x32xbf16, #tpu.memory_space<vmem>>, vector<32x32xbf16>
    %cst = arith.constant dense<0.000000e+00> : vector<16x32xf32>
    %2 = tpu.matmul %0, %1, %cst {dimension_numbers = #tpu.dot_dimension_numbers<[1], [0], [0], [1], [0, 0, 1, 1], [], []>} : vector<16x32xbf16>, vector<32x32xbf16>, vector<16x32xf32> -> vector<16x32xf32>
    %c0_3 = arith.constant 0 : index
    %c0_4 = arith.constant 0 : index
    %c0_5 = arith.constant 0 : index
    %3 = vector.load %arg4[%c0_3, %c0_4, %c0_5] : memref<3x1x32xf32, #tpu.memory_space<vmem>>, vector<1x1x32xf32>
    %4 = vector.shape_cast %3 : vector<1x1x32xf32> to vector<1x32xf32>
    %5 = vector.broadcast %4 : vector<1x32xf32> to vector<16x32xf32>
    %6 = arith.addf %2, %5 : vector<16x32xf32>
    %c0_6 = arith.constant 0 : index
    %c0_7 = arith.constant 0 : index
    %7 = vector.load %arg2[%c0_6, %c0_7] : memref<16x32xf32, #tpu.memory_space<vmem>>, vector<16x32xf32>
    %8 = arith.addf %7, %6 : vector<16x32xf32>
    %cst_8 = arith.constant dense<0.000000e+00> : vector<16xf32>
    %9 = vector.multi_reduction <add>, %8, %cst_8 [1] : vector<16x32xf32> to vector<16xf32>
    %10 = vector.shape_cast %9 : vector<16xf32> to vector<16x1xf32>
    %cst_9 = arith.constant 3.200000e+01 : f32
    %11 = vector.broadcast %cst_9 : f32 to vector<16x1xf32>
    %12 = arith.divf %10, %11 : vector<16x1xf32>
    %13 = vector.broadcast %12 : vector<16x1xf32> to vector<16x32xf32>
    %14 = arith.subf %8, %13 : vector<16x32xf32>
    %15 = arith.mulf %14, %14 : vector<16x32xf32>
    %cst_10 = arith.constant dense<0.000000e+00> : vector<16xf32>
    %16 = vector.multi_reduction <add>, %15, %cst_10 [1] : vector<16x32xf32> to vector<16xf32>
    %17 = vector.shape_cast %16 : vector<16xf32> to vector<16x1xf32>
    %cst_11 = arith.constant 3.200000e+01 : f32
    %18 = vector.broadcast %cst_11 : f32 to vector<16x1xf32>
    %19 = arith.divf %17, %18 : vector<16x1xf32>
    %cst_12 = arith.constant 9.99999997E-7 : f32
    %20 = vector.broadcast %cst_12 : f32 to vector<16x1xf32>
    %21 = arith.addf %19, %20 : vector<16x1xf32>
    %22 = math.rsqrt %21 : vector<16x1xf32>
    %23 = vector.broadcast %22 : vector<16x1xf32> to vector<16x32xf32>
    %24 = arith.mulf %14, %23 : vector<16x32xf32>
    %c1 = arith.constant 1 : index
    %c0_13 = arith.constant 0 : index
    %c0_14 = arith.constant 0 : index
    %25 = vector.load %arg4[%c1, %c0_13, %c0_14] : memref<3x1x32xf32, #tpu.memory_space<vmem>>, vector<1x1x32xf32>
    %26 = vector.shape_cast %25 : vector<1x1x32xf32> to vector<1x32xf32>
    %27 = vector.broadcast %26 : vector<1x32xf32> to vector<16x32xf32>
    %28 = arith.mulf %24, %27 : vector<16x32xf32>
    %c2 = arith.constant 2 : index
    %c0_15 = arith.constant 0 : index
    %c0_16 = arith.constant 0 : index
    %29 = vector.load %arg4[%c2, %c0_15, %c0_16] : memref<3x1x32xf32, #tpu.memory_space<vmem>>, vector<1x1x32xf32>
    %30 = vector.shape_cast %29 : vector<1x1x32xf32> to vector<1x32xf32>
    %31 = vector.broadcast %30 : vector<1x32xf32> to vector<16x32xf32>
    %32 = arith.addf %28, %31 : vector<16x32xf32>
    %c0_17 = arith.constant 0 : index
    %c0_18 = arith.constant 0 : index
    %33 = vector.load %arg5[%c0_17, %c0_18] : memref<16x32xf32, #tpu.memory_space<vmem>>, vector<16x32xf32>
    tpu.vector_store %arg5[%c0_17, %c0_18], %32 {strides = array<i32>} : memref<16x32xf32, #tpu.memory_space<vmem>>, vector<16x32xf32>,
    return
  }
  func.func @transform_0(%arg0: i32) -> (i32, i32) {
    %c0_i32 = arith.constant 0 : i32
    %c0_i32_0 = arith.constant 0 : i32
    return %arg0, %c0_i32 : i32, i32
  }
  func.func @transform_1(%arg0: i32) -> (i32, i32) {
    %c0_i32 = arith.constant 0 : i32
    %c0_i32_0 = arith.constant 0 : i32
    return %arg0, %c0_i32 : i32, i32
  }
  func.func @transform_2(%arg0: i32) -> (i32, i32) {
    %c0_i32 = arith.constant 0 : i32
    %c0_i32_0 = arith.constant 0 : i32
    %c0_i32_1 = arith.constant 0 : i32
    return %c0_i32, %c0_i32_0 : i32, i32
  }
  func.func @transform_3(%arg0: i32) -> (i32, i32, i32) {
    %c0_i32 = arith.constant 0 : i32
    %c0_i32_0 = arith.constant 0 : i32
    %c0_i32_1 = arith.constant 0 : i32
    %c0_i32_2 = arith.constant 0 : i32
    return %c0_i32, %c0_i32_0, %c0_i32_1 : i32, i32, i32
  }
  func.func @transform_4(%arg0: i32) -> (i32, i32) {
    %c0_i32 = arith.constant 0 : i32
    %c0_i32_0 = arith.constant 0 : i32
    return %arg0, %c0_i32 : i32, i32
  }
}

</mosaic_0001>

<llo_original>
// kernel: multi_head_attention.3
$region0: #{multi_head_attention.3}
  #allocation0 [shape = 'u32[]', space=smem, size = 0x4, offset = 0x4, fixed_abs, tag = 'smem constant byte address 0x4 - core index']
  #allocation1 [shape = 'u32[144,128]{1,0:T(1,128)}', space=vmem, size = 0x12000, scoped, tag = 'internal scratch']
  %s0 = inlined_call_operand.hbm [shape: f32[32,32], index: 0, kind: input, shape index: {}]
  %s1 = inlined_call_operand.hbm [shape: f32[32,32], index: 1, kind: input, shape index: {}]
  %s2 = inlined_call_operand.vmem [shape: f32[32,32], index: 2, kind: input, shape index: {}]
  %s3 = inlined_call_operand.hbm [shape: bf16[3,32,32], index: 3, kind: input, shape index: {}]
  %s4 = inlined_call_operand.vmem [shape: f32[3,1,32], index: 4, kind: input, shape index: {}]
  %s5 = inlined_call_operand.vmem [shape: bf16[3,32,32], index: 5, kind: output, shape index: {}]
  %s6 = sld [smem:[#allocation0]]
  $region102: #{multi_head_attention.3} parent=0
    _
  %s8 = ssub.s32 1, %s6
  %s9 = scalar_select 0, %s8, %s6
  $region1: #{multi_head_attention.3} parent=0
    #allocation2 [shape = 'u8[16384]{0}', space=vmem, size = 0x4000, scoped, tag = 'input window, operand 0']
    #allocation3 [shape = 's32[2]{0}', space=sflag, size = 0x8, scoped, tag = 'scoped memory for multi_head_attention.3']
    #allocation4 [shape = 'u8[16384]{0}', space=vmem, size = 0x4000, scoped, tag = 'input window, operand 1']
    #allocation5 [shape = 's32[2]{0}', space=sflag, size = 0x8, scoped, tag = 'scoped memory for multi_head_attention.3']
    #allocation6 [shape = 'u8[24576]{0}', space=vmem, size = 0x6000, scoped, tag = 'input window, operand 3, single buffered']
    #allocation7 [shape = 'u8[24576]{0}', space=vmem, size = 0x6000, scoped, tag = 'output window, operand 0']
    %10 = vsyncpa [#allocation3], 0
    %s11 = scalar_lea.sflag [#allocation3], 1
    %12 = vsyncpa %s11, 0
    %13 = vsyncpa [#allocation5], 0
    %s14 = scalar_lea.sflag [#allocation5], 1
    %15 = vsyncpa %s14, 0
    loop: start=0, step=1, limit=4
    $region2: #{multi_head_attention.3} parent=1 // loop_pre_header
      _
    $region3: #{multi_head_attention.3} parent=1 // loop_header
      %s17 = sphi 0, %s21
      %p18 = scmp.ge.s32.totalorder %s17, 4
      %s27 = sphi 0, %s29
      %s30 = sphi 0, %s27
      %s31 = sphi 0, %s30
      %s47 = sphi 0, %s31
      %s53 = sphi 0, %s55
      %s56 = sphi 0, %s53
      %s57 = sphi 0, %s56
      %s73 = sphi 0, %s57
      %s79 = sphi 0, %s81
      %s82 = sphi 0, %s79
      %s83 = sphi 0, %s82
      %s99 = sphi 0, %s83
      %s103 = sphi 0, %s103
      %s105 = sphi 0, %s103
      %s106 = sphi 0, %s105
      %s120 = sphi 0, %s106
      %s124 = sphi 0, %s124
      %s126 = sphi 0, %s124
      %s127 = sphi 0, %s126
      %s141 = sphi 0, %s127
      %s147 = sphi 0, %s149
      %s150 = sphi 0, %s147
      %s151 = sphi 0, %s150
      %s167 = sphi 0, %s151
    $region4: #{multi_head_attention.3} parent=1 // loop_header_branch
      %20 = sbr.rel (%p18) target = $region8
    $region5: #{multi_head_attention.3} parent=1 // loop_body
      %s22 = ssub.s32 %s17, 1
      %s23 = ssub.s32 %s17, 2
      %s24 = sadd.s32 %s17, 1
      %s25 = ssub.s32 %s17, %s24
      %p26 = scmp.eq.s32.totalorder %s25, 0
      %s28 = sadd.s32 %s27, 1
      %s29 = scalar_select %p26, %s27, %s28
      %p32 = pneg %p26
      %p33 = scmp.eq.s32.totalorder %s17, 1
      %p34 = por %p32, %p33
      %p35 = scmp.ne.s32.totalorder %s27, %s30
      %p36 = scmp.eq.s32.totalorder %s17, 0
      %p37 = por %p35, %p36
      %p38 = scmp.ne.s32.totalorder %s27, %s30
      %p39 = scmp.eq.s32.totalorder %s22, 1
      %p40 = por %p38, %p39
      %p41 = scmp.ne.s32.totalorder %s30, %s31
      %p42 = scmp.eq.s32.totalorder %s22, 0
      %p43 = por %p41, %p42
      %p44 = scmp.ne.s32.totalorder %s30, %s31
      %p45 = scmp.eq.s32.totalorder %s23, 1
      %p46 = por %p44, %p45
      %p48 = scmp.ne.s32.totalorder %s31, %s47
      %p49 = scmp.eq.s32.totalorder %s23, 0
      %p50 = por %p48, %p49
      %s51 = ssub.s32 %s17, %s24
      %p52 = scmp.eq.s32.totalorder %s51, 0
      %s54 = sadd.s32 %s53, 1
      %s55 = scalar_select %p52, %s53, %s54
      %p58 = pneg %p52
      %p59 = scmp.eq.s32.totalorder %s17, 1
      %p60 = por %p58, %p59
      %p61 = scmp.ne.s32.totalorder %s53, %s56
      %p62 = scmp.eq.s32.totalorder %s17, 0
      %p63 = por %p61, %p62
      %p64 = scmp.ne.s32.totalorder %s53, %s56
      %p65 = scmp.eq.s32.totalorder %s22, 1
      %p66 = por %p64, %p65
      %p67 = scmp.ne.s32.totalorder %s56, %s57
      %p68 = scmp.eq.s32.totalorder %s22, 0
      %p69 = por %p67, %p68
      %p70 = scmp.ne.s32.totalorder %s56, %s57
      %p71 = scmp.eq.s32.totalorder %s23, 1
      %p72 = por %p70, %p71
      %p74 = scmp.ne.s32.totalorder %s57, %s73
      %p75 = scmp.eq.s32.totalorder %s23, 0
      %p76 = por %p74, %p75
      %s77 = ssub.s32 %s17, %s24
      %p78 = scmp.eq.s32.totalorder %s77, 0
      %s80 = sadd.s32 %s79, 1
      %s81 = scalar_select %p78, %s79, %s80
      %p84 = pneg %p78
      %p85 = scmp.eq.s32.totalorder %s17, 1
      %p86 = por %p84, %p85
      %p87 = scmp.ne.s32.totalorder %s79, %s82
      %p88 = scmp.eq.s32.totalorder %s17, 0
      %p89 = por %p87, %p88
      %p90 = scmp.ne.s32.totalorder %s79, %s82
      %p91 = scmp.eq.s32.totalorder %s22, 1
      %p92 = por %p90, %p91
      %p93 = scmp.ne.s32.totalorder %s82, %s83
      %p94 = scmp.eq.s32.totalorder %s22, 0
      %p95 = por %p93, %p94
      %p96 = scmp.ne.s32.totalorder %s82, %s83
      %p97 = scmp.eq.s32.totalorder %s23, 1
      %p98 = por %p96, %p97
      %p100 = scmp.ne.s32.totalorder %s83, %s99
      %p101 = scmp.eq.s32.totalorder %s23, 0
      %p102 = por %p100, %p101
      %s104 = sadd.s32 %s103, 1
      %p107 = scmp.eq.s32.totalorder %s17, 1
      %p108 = scmp.ne.s32.totalorder %s103, %s105
      %p109 = scmp.eq.s32.totalorder %s17, 0
      %p110 = por %p108, %p109
      %p111 = scmp.ne.s32.totalorder %s103, %s105
      %p112 = scmp.eq.s32.totalorder %s22, 1
      %p113 = por %p111, %p112
      %p114 = scmp.ne.s32.totalorder %s105, %s106
      %p115 = scmp.eq.s32.totalorder %s22, 0
      %p116 = por %p114, %p115
      %p117 = scmp.ne.s32.totalorder %s105, %s106
      %p118 = scmp.eq.s32.totalorder %s23, 1
      %p119 = por %p117, %p118
      %p121 = scmp.ne.s32.totalorder %s106, %s120
      %p122 = scmp.eq.s32.totalorder %s23, 0
      %p123 = por %p121, %p122
      %s125 = sadd.s32 %s124, 1
      %p128 = scmp.eq.s32.totalorder %s17, 1
      %p129 = scmp.ne.s32.totalorder %s124, %s126
      %p130 = scmp.eq.s32.totalorder %s17, 0
      %p131 = por %p129, %p130
      %p132 = scmp.ne.s32.totalorder %s124, %s126
      %p133 = scmp.eq.s32.totalorder %s22, 1
      %p134 = por %p132, %p133
      %p135 = scmp.ne.s32.totalorder %s126, %s127
      %p136 = scmp.eq.s32.totalorder %s22, 0
      %p137 = por %p135, %p136
      %p138 = scmp.ne.s32.totalorder %s126, %s127
      %p139 = scmp.eq.s32.totalorder %s23, 1
      %p140 = por %p138, %p139
      %p142 = scmp.ne.s32.totalorder %s127, %s141
      %p143 = scmp.eq.s32.totalorder %s23, 0
      %p144 = por %p142, %p143
      %s145 = ssub.s32 %s17, %s24
      %p146 = scmp.eq.s32.totalorder %s145, 0
      %s148 = sadd.s32 %s147, 1
      %s149 = scalar_select %p146, %s147, %s148
      %p152 = pneg %p146
      %p153 = scmp.eq.s32.totalorder %s17, 1
      %p154 = por %p152, %p153
      %p155 = scmp.ne.s32.totalorder %s147, %s150
      %p156 = scmp.eq.s32.totalorder %s17, 0
      %p157 = por %p155, %p156
      %p158 = scmp.ne.s32.totalorder %s147, %s150
      %p159 = scmp.eq.s32.totalorder %s22, 1
      %p160 = por %p158, %p159
      %p161 = scmp.ne.s32.totalorder %s150, %s151
      %p162 = scmp.eq.s32.totalorder %s22, 0
      %p163 = por %p161, %p162
      %p164 = scmp.ne.s32.totalorder %s150, %s151
      %p165 = scmp.eq.s32.totalorder %s23, 1
      %p166 = por %p164, %p165
      %p168 = scmp.ne.s32.totalorder %s151, %s167
      %p169 = scmp.eq.s32.totalorder %s23, 0
      %p170 = por %p168, %p169
      %p171 = scmp.le.s32.totalorder 1, %s17
      %p172 = scmp.lt.s32.totalorder %s17, 3
      %p173 = pnand %p171, %p172
      %p174 = pneg %p173
      // Predicated region
      $region9: #{multi_head_attention.3} parent=5 // pred_check
        _
      $region10: #{multi_head_attention.3} parent=5 // pred_check_branch
        %176 = sbr.rel (%p173) target = $region12
      $region11: #{multi_head_attention.3} parent=5 // pred_region
        %s177 = ssub.s32 %s17, 1
        // Predicated region
        $region13: #{multi_head_attention.3} parent=11 // pred_check
          %p178 = pneg %p116
        $region14: #{multi_head_attention.3} parent=11 // pred_check_branch
          %180 = sbr.rel (%p178) target = $region16
        $region15: #{multi_head_attention.3} parent=11 // pred_region
          %s182 = ssub.s32 768, 768
          %183 = vsyncadd [#allocation5], %s182
          %s184 = sshll.u32 [#allocation6], 4
          %s185 = int_to_ptr.vmem [resolvable:$true] %s184
          %190 = dma.hbm_to_vmem [thread:$0]  %s3, 768, %s185, [#allocation5], 64, 64, 4
        $region16: #{multi_head_attention.3} parent=11 // pred_fallthru
          _
        // Predicated region
        $region17: #{multi_head_attention.3} parent=11 // pred_check
          %p191 = pneg %p137
        $region18: #{multi_head_attention.3} parent=11 // pred_check_branch
          %193 = sbr.rel (%p191) target = $region20
        $region19: #{multi_head_attention.3} parent=11 // pred_region
          _
        $region20: #{multi_head_attention.3} parent=11 // pred_fallthru
          _
      $region12: #{multi_head_attention.3} parent=5 // pred_fallthru
        _
      %p194 = scmp.lt.s32.totalorder %s17, 2
      // Predicated region
      $region21: #{multi_head_attention.3} parent=5 // pred_check
        %p195 = pneg %p194
      $region22: #{multi_head_attention.3} parent=5 // pred_check_branch
        %197 = sbr.rel (%p195) target = $region24
      $region23: #{multi_head_attention.3} parent=5 // pred_region
        // Predicated region
        $region25: #{multi_head_attention.3} parent=23 // pred_check
          %p198 = pneg %p37
        $region26: #{multi_head_attention.3} parent=23 // pred_check_branch
          %200 = sbr.rel (%p198) target = $region28
        $region27: #{multi_head_attention.3} parent=23 // pred_region
          %s201 = sand.u32 %s27, 1
          %s202 = scalar_lea.sflag [#allocation3], %s201
          %s203 = sand.u32 %s27, 1
          %s204 = smul.addr %s203, 16
          %s205 = scalar_lea.vmem [#allocation2], %s204
          %s206 = smul.u32 2, %s17
          %s208 = ssub.s32 256, 256
          %209 = vsyncadd %s202, %s208
          %s210 = smul.addr %s206, 128
          %s211 = scalar_lea.hbm %s0, %s210
          %s212 = sshll.u32 %s205, 4
          %s213 = int_to_ptr.vmem [resolvable:$true] %s212
          %218 = dma.hbm_to_vmem [thread:$0]  %s211, 256, %s213, %s202, 128, 128, 8
        $region28: #{multi_head_attention.3} parent=23 // pred_fallthru
          _
        // Predicated region
        $region29: #{multi_head_attention.3} parent=23 // pred_check
          %p219 = pneg %p63
        $region30: #{multi_head_attention.3} parent=23 // pred_check_branch
          %221 = sbr.rel (%p219) target = $region32
        $region31: #{multi_head_attention.3} parent=23 // pred_region
          %s222 = sand.u32 %s17, 1
          %s223 = scalar_lea.sflag [#allocation5], %s222
          %s224 = sand.u32 %s53, 1
          %s225 = smul.addr %s224, 16
          %s226 = scalar_lea.vmem [#allocation4], %s225
          %s227 = smul.u32 2, %s17
          %s229 = ssub.s32 256, 256
          %230 = vsyncadd %s223, %s229
          %s231 = smul.addr %s227, 128
          %s232 = scalar_lea.hbm %s1, %s231
          %s233 = sshll.u32 %s226, 4
          %s234 = int_to_ptr.vmem [resolvable:$true] %s233
          %239 = dma.hbm_to_vmem [thread:$0]  %s232, 256, %s234, %s223, 128, 128, 8
        $region32: #{multi_head_attention.3} parent=23 // pred_fallthru
          _
        // Predicated region
        $region33: #{multi_head_attention.3} parent=23 // pred_check
          %p240 = pneg %p89
        $region34: #{multi_head_attention.3} parent=23 // pred_check_branch
          %242 = sbr.rel (%p240) target = $region36
        $region35: #{multi_head_attention.3} parent=23 // pred_region
          %s243 = smul.u32 2, %s17
          %p244 = scmp.lt.s32.totalorder %s243, 3
          %s245 = scalar_select %p244, %s243, 3
          %s246 = smul.addr %s245, 8
          %s247 = scalar_lea.vmem %s2, %s246
          %s248 = smul.u32 2, %s17
        $region36: #{multi_head_attention.3} parent=23 // pred_fallthru
          _
      $region24: #{multi_head_attention.3} parent=5 // pred_fallthru
        _
      %p249 = scmp.le.s32.totalorder 1, %s17
      %p250 = scmp.lt.s32.totalorder %s17, 3
      %p251 = pnand %p249, %p250
      %p252 = pneg %p251
      // Predicated region
      $region37: #{multi_head_attention.3} parent=5 // pred_check
        _
      $region38: #{multi_head_attention.3} parent=5 // pred_check_branch
        %254 = sbr.rel (%p251) target = $region40
      $region39: #{multi_head_attention.3} parent=5 // pred_region
        %s255 = ssub.s32 %s17, 1
        %s256 = sand.u32 %s30, 1
        %s257 = scalar_lea.sflag [#allocation3], %s256
        %s258 = sand.u32 %s30, 1
        %s259 = smul.addr %s258, 16
        %s260 = scalar_lea.vmem [#allocation2], %s259
        // Predicated region
        $region41: #{multi_head_attention.3} parent=39 // pred_check
          %p261 = pneg %p43
        $region42: #{multi_head_attention.3} parent=39 // pred_check_branch
          %263 = sbr.rel (%p261) target = $region44
        $region43: #{multi_head_attention.3} parent=39 // pred_region
          %264 = dma.done %s257, 256
        $region44: #{multi_head_attention.3} parent=39 // pred_fallthru
          _
        %s265 = sand.u32 %s22, 1
        %s266 = scalar_lea.sflag [#allocation5], %s265
        %s267 = sand.u32 %s56, 1
        %s268 = smul.addr %s267, 16
        %s269 = scalar_lea.vmem [#allocation4], %s268
        // Predicated region
        $region45: #{multi_head_attention.3} parent=39 // pred_check
          %p270 = pneg %p69
        $region46: #{multi_head_attention.3} parent=39 // pred_check_branch
          %272 = sbr.rel (%p270) target = $region48
        $region47: #{multi_head_attention.3} parent=39 // pred_region
          %273 = dma.done %s266, 256
        $region48: #{multi_head_attention.3} parent=39 // pred_fallthru
          _
        // Predicated region
        $region49: #{multi_head_attention.3} parent=39 // pred_check
          %p274 = pneg %p116
        $region50: #{multi_head_attention.3} parent=39 // pred_check_branch
          %276 = sbr.rel (%p274) target = $region52
        $region51: #{multi_head_attention.3} parent=39 // pred_region
          %277 = dma.done [#allocation5], 768
        $region52: #{multi_head_attention.3} parent=39 // pred_fallthru
          _
        %s278 = sand.u32 %s30, 1
        %s279 = scalar_lea.sflag [#allocation3], %s278
        %s280 = sand.u32 %s30, 1
        %s281 = smul.addr %s280, 16
        %s282 = scalar_lea.vmem [#allocation2], %s281
        %p283 = pneg %p43
        %p284 = pneg %p40
        %s285 = sand.u32 %s22, 1
        %s286 = scalar_lea.sflag [#allocation5], %s285
        %s287 = sand.u32 %s56, 1
        %s288 = smul.addr %s287, 16
        %s289 = scalar_lea.vmem [#allocation4], %s288
        %p290 = pneg %p69
        %p291 = pneg %p66
        %s292 = smul.u32 2, %s22
        %p293 = scmp.lt.s32.totalorder %s292, 3
        %s294 = scalar_select %p293, %s292, 3
        %s295 = smul.addr %s294, 8
        %s296 = scalar_lea.vmem %s2, %s295
        %p297 = pneg %p95
        %p298 = pneg %p92
        %p299 = pneg %p116
        %p300 = pneg %p113
        %p301 = pneg %p137
        %p302 = pneg %p134
        %p303 = pneg %p163
        %p304 = pneg %p160
        %s305 = sand.u32 %s150, 1
        %s306 = sand.u32 %s150, 1
        %s307 = smul.addr %s306, 24
        %s308 = scalar_lea.vmem [#allocation7], %s307
        %s309 = smul.u32 2, %s22
        %s310 = smul.u32 2, %s22
        %s311 = smul.u32 2, %s22
        %p312 = scmp.lt.s32.totalorder %s311, 3
        %s313 = scalar_select %p312, %s311, 3
        %s314 = smul.addr %s313, 8
        %s315 = scalar_lea.vmem %s2, %s314
        %s316 = smul.u32 2, %s22
        %s317 = smul.u32 2, %s22
        %v319 = vld [vmem:[%s260] sm:$0xff]
        %v320 = vld [vmem:[%s260 + $0x8] sm:$0xff]
        %v321 = vpack.c.bf16 %v320, %v319
        %v322 = vld [vmem:[#allocation6] sm:$0xf]
        %v323 = vld [vmem:[#allocation6 + $0x4] sm:$0xf]
        %v324 = vld [vmem:[#allocation6 + $0x8] sm:$0xf]
        %v325 = vld [vmem:[#allocation6 + $0xc] sm:$0xf]
        %v326 = vld [vmem:[%s4] sm:$0x1]
        %v328 = vlaneseq
        %v329 = vshrl.u32 %v328, 7
        %v330 = vsub.s32 0, %v329
        %v331 = vrot.slane %v326, %v330
        %v337 = vunpack.c.l.b16 %v322
        %v338 = vunpack.c.l.b16 %v323
        %v339 = vunpack.c.l.b16 %v324
        %v340 = vunpack.c.l.b16 %v325
        %v341 = vpack.c.b16 %v338, %v337
        %v342 = vpack.c.b16 %v340, %v339
        %vm345 = vcmask 261120
        %v347 = vsel %vm345, %v321, 0
        %349 = vmatprep.subr.bf16.mxu0 0
        %350 = vmatpush1.bf16.msra.mxu0 0
        %351 = vmatprep.subr.bf16.mxu0 0
        %352 = vmatpush1.bf16.msra.mxu0 0
        %353 = vmatprep.subr.bf16.mxu0 0
        %354 = vmatpush1.bf16.msra.mxu0 0
        %355 = vmatprep.subr.bf16.mxu0 0
        %356 = vmatpush1.bf16.msra.mxu0 0
        %357 = vmatprep.subr.bf16.mxu0 0
        %358 = vmatpush1.bf16.msra.mxu0 0
        %359 = vmatprep.subr.bf16.mxu0 0
        %360 = vmatpush1.bf16.msra.mxu0 0
        %361 = vmatprep.subr.bf16.mxu0 0
        %362 = vmatpush1.bf16.msra.mxu0 %v342
        %363 = vmatprep.subr.bf16.mxu0 0
        %364 = vmatpush1.bf16.msra.mxu0 %v341
        %365 = vmatprep.subr.bf16.mxu0 0
        %366 = vmatpush2.bf16.msra.mxu0 0
        %367 = vmatprep.subr.bf16.mxu0 0
        %368 = vmatpush2.bf16.msra.mxu0 0
        %369 = vmatprep.subr.bf16.mxu0 0
        %370 = vmatpush2.bf16.msra.mxu0 0
        %371 = vmatprep.subr.bf16.mxu0 0
        %372 = vmatpush2.bf16.msra.mxu0 0
        %373 = vmatprep.subr.bf16.mxu0 0
        %374 = vmatpush2.bf16.msra.mxu0 0
        %375 = vmatprep.subr.bf16.mxu0 0
        %376 = vmatpush2.bf16.msra.mxu0 0
        %377 = vmatprep.subr.bf16.mxu0 0
        %378 = vmatpush2.bf16.msra.mxu0 0
        %379 = vmatprep.subr.bf16.mxu0 0
        %380 = vmatpush2.bf16.msra.mxu0 0
        %381 = vmatprep.mubr.bf16.mxu0 0
        %382 = vmatmul.mubr.bf16.gmra.mxu0 %v347
        %v383 = vpop.f32.mrf.mxu0
        %v384 = vadd.f32 %v331, %v383
        %v385 = vpop.f32.mrf.mxu0
        %v386 = vpop.f32.mrf.mxu0
        %v387 = vadd.f32 %v331, %v386
        %v388 = vpop.f32.mrf.mxu0
        %389 = vdwg.mxu0
        %v390 = vpack.c.bf16 %v387, %v384
        %v392 = vunpack.c.l.b16 %v390
        %v393 = vunpack.c.h.b16 %v390
        %v394 = vpack.c.b16 %v392, %v392
        %v395 = vpack.c.b16 %v393, %v393
        %vm398 = vcmask 257024
        %399 = vst.msk [vmem:[%s308] sm:$0xf] %vm398, %v394
        %400 = vst.msk [vmem:[%s308 + $0x4] sm:$0xf] %vm398, %v395
        %v401 = vld [vmem:[%s269] sm:$0xff]
        %v402 = vld [vmem:[%s269 + $0x8] sm:$0xff]
        %v403 = vpack.c.bf16 %v402, %v401
        %s404 = scalar_lea.vmem [#allocation6], 16
        %v405 = vld [vmem:[%s404] sm:$0xf]
        %v406 = vld [vmem:[%s404 + $0x4] sm:$0xf]
        %v407 = vld [vmem:[%s404 + $0x8] sm:$0xf]
        %v408 = vld [vmem:[%s404 + $0xc] sm:$0xf]
        %s409 = scalar_lea.vmem %s4, 1
        %v410 = vld [vmem:[%s409] sm:$0x1]
        %v412 = vlaneseq
        %v413 = vshrl.u32 %v412, 7
        %v414 = vsub.s32 0, %v413
        %v415 = vrot.slane %v410, %v414
        %v421 = vunpack.c.l.b16 %v405
        %v422 = vunpack.c.l.b16 %v406
        %v423 = vunpack.c.l.b16 %v407
        %v424 = vunpack.c.l.b16 %v408
        %v425 = vpack.c.b16 %v422, %v421
        %v426 = vpack.c.b16 %v424, %v423
        %v430 = vsel %vm345, %v403, 0
        %432 = vmatprep.subr.bf16.mxu0 0
        %433 = vmatpush1.bf16.msra.mxu0 0
        %434 = vmatprep.subr.bf16.mxu0 0
        %435 = vmatpush1.bf16.msra.mxu0 0
        %436 = vmatprep.subr.bf16.mxu0 0
        %437 = vmatpush1.bf16.msra.mxu0 0
        %438 = vmatprep.subr.bf16.mxu0 0
        %439 = vmatpush1.bf16.msra.mxu0 0
        %440 = vmatprep.subr.bf16.mxu0 0
        %441 = vmatpush1.bf16.msra.mxu0 0
        %442 = vmatprep.subr.bf16.mxu0 0
        %443 = vmatpush1.bf16.msra.mxu0 0
        %444 = vmatprep.subr.bf16.mxu0 0
        %445 = vmatpush1.bf16.msra.mxu0 %v426
        %446 = vmatprep.subr.bf16.mxu0 0
        %447 = vmatpush1.bf16.msra.mxu0 %v425
        %448 = vmatprep.subr.bf16.mxu0 0
        %449 = vmatpush2.bf16.msra.mxu0 0
        %450 = vmatprep.subr.bf16.mxu0 0
        %451 = vmatpush2.bf16.msra.mxu0 0
        %452 = vmatprep.subr.bf16.mxu0 0
        %453 = vmatpush2.bf16.msra.mxu0 0
        %454 = vmatprep.subr.bf16.mxu0 0
        %455 = vmatpush2.bf16.msra.mxu0 0
        %456 = vmatprep.subr.bf16.mxu0 0
        %457 = vmatpush2.bf16.msra.mxu0 0
        %458 = vmatprep.subr.bf16.mxu0 0
        %459 = vmatpush2.bf16.msra.mxu0 0
        %460 = vmatprep.subr.bf16.mxu0 0
        %461 = vmatpush2.bf16.msra.mxu0 0
        %462 = vmatprep.subr.bf16.mxu0 0
        %463 = vmatpush2.bf16.msra.mxu0 0
        %464 = vmatprep.mubr.bf16.mxu0 0
        %465 = vmatmul.mubr.bf16.gmra.mxu0 %v430
        %v466 = vpop.f32.mrf.mxu0
        %v467 = vadd.f32 %v415, %v466
        %v468 = vpop.f32.mrf.mxu0
        %v469 = vpop.f32.mrf.mxu0
        %v470 = vadd.f32 %v415, %v469
        %v471 = vpop.f32.mrf.mxu0
        %472 = vdwg.mxu0
        %v473 = vpack.c.bf16 %v470, %v467
        %v475 = vunpack.c.l.b16 %v473
        %v476 = vunpack.c.h.b16 %v473
        %v477 = vpack.c.b16 %v475, %v475
        %v478 = vpack.c.b16 %v476, %v476
        %s481 = scalar_lea.vmem %s308, 8 [#allocation7]
        %482 = vst.msk [vmem:[%s481] sm:$0xf] %vm398, %v477
        %483 = vst.msk [vmem:[%s481 + $0x4] sm:$0xf] %vm398, %v478
        %v484 = vld [vmem:[%s315] sm:$0xff]
        %v485 = vld [vmem:[%s315 + $0x8] sm:$0xff]
        %v486 = vpack.c.bf16 %v485, %v484
        %s487 = scalar_lea.vmem [#allocation6], 32
        %v488 = vld [vmem:[%s487] sm:$0xf]
        %v489 = vld [vmem:[%s487 + $0x4] sm:$0xf]
        %v490 = vld [vmem:[%s487 + $0x8] sm:$0xf]
        %v491 = vld [vmem:[%s487 + $0xc] sm:$0xf]
        %s492 = scalar_lea.vmem %s4, 2
        %v493 = vld [vmem:[%s492] sm:$0x1]
        %v495 = vlaneseq
        %v496 = vshrl.u32 %v495, 7
        %v497 = vsub.s32 0, %v496
        %v498 = vrot.slane %v493, %v497
        %v504 = vunpack.c.l.b16 %v488
        %v505 = vunpack.c.l.b16 %v489
        %v506 = vunpack.c.l.b16 %v490
        %v507 = vunpack.c.l.b16 %v491
        %v508 = vpack.c.b16 %v505, %v504
        %v509 = vpack.c.b16 %v507, %v506
        %v513 = vsel %vm345, %v486, 0
        %515 = vmatprep.subr.bf16.mxu0 0
        %516 = vmatpush1.bf16.msra.mxu0 0
        %517 = vmatprep.subr.bf16.mxu0 0
        %518 = vmatpush1.bf16.msra.mxu0 0
        %519 = vmatprep.subr.bf16.mxu0 0
        %520 = vmatpush1.bf16.msra.mxu0 0
        %521 = vmatprep.subr.bf16.mxu0 0
        %522 = vmatpush1.bf16.msra.mxu0 0
        %523 = vmatprep.subr.bf16.mxu0 0
        %524 = vmatpush1.bf16.msra.mxu0 0
        %525 = vmatprep.subr.bf16.mxu0 0
        %526 = vmatpush1.bf16.msra.mxu0 0
        %527 = vmatprep.subr.bf16.mxu0 0
        %528 = vmatpush1.bf16.msra.mxu0 %v509
        %529 = vmatprep.subr.bf16.mxu0 0
        %530 = vmatpush1.bf16.msra.mxu0 %v508
        %531 = vmatprep.subr.bf16.mxu0 0
        %532 = vmatpush2.bf16.msra.mxu0 0
        %533 = vmatprep.subr.bf16.mxu0 0
        %534 = vmatpush2.bf16.msra.mxu0 0
        %535 = vmatprep.subr.bf16.mxu0 0
        %536 = vmatpush2.bf16.msra.mxu0 0
        %537 = vmatprep.subr.bf16.mxu0 0
        %538 = vmatpush2.bf16.msra.mxu0 0
        %539 = vmatprep.subr.bf16.mxu0 0
        %540 = vmatpush2.bf16.msra.mxu0 0
        %541 = vmatprep.subr.bf16.mxu0 0
        %542 = vmatpush2.bf16.msra.mxu0 0
        %543 = vmatprep.subr.bf16.mxu0 0
        %544 = vmatpush2.bf16.msra.mxu0 0
        %545 = vmatprep.subr.bf16.mxu0 0
        %546 = vmatpush2.bf16.msra.mxu0 0
        %547 = vmatprep.mubr.bf16.mxu0 0
        %548 = vmatmul.mubr.bf16.gmra.mxu0 %v513
        %v549 = vpop.f32.mrf.mxu0
        %v550 = vadd.f32 %v498, %v549
        %v551 = vpop.f32.mrf.mxu0
        %v552 = vpop.f32.mrf.mxu0
        %v553 = vadd.f32 %v498, %v552
        %v554 = vpop.f32.mrf.mxu0
        %555 = vdwg.mxu0
        %v556 = vpack.c.bf16 %v553, %v550
        %v558 = vunpack.c.l.b16 %v556
        %v559 = vunpack.c.h.b16 %v556
        %v560 = vpack.c.b16 %v558, %v558
        %v561 = vpack.c.b16 %v559, %v559
        %s564 = scalar_lea.vmem %s308, 16 [#allocation7]
        %565 = vst.msk [vmem:[%s564] sm:$0xf] %vm398, %v560
        %566 = vst.msk [vmem:[%s564 + $0x4] sm:$0xf] %vm398, %v561
        %s567 = sand.u32 %s150, 1
        %s568 = sand.u32 %s150, 1
        %s569 = smul.addr %s568, 24
        %s570 = scalar_lea.vmem [#allocation7], %s569
        // Predicated region
        $region53: #{multi_head_attention.3} parent=39 // pred_check
          %p571 = pneg %p160
        $region54: #{multi_head_attention.3} parent=39 // pred_check_branch
          %573 = sbr.rel (%p571) target = $region56
        $region55: #{multi_head_attention.3} parent=39 // pred_region
          %s574 = smul.u32 2, %s22
          %s575 = smul.addr %s574, 4
          %s576 = scalar_lea.vmem %s5, %s575
          // Predicated region
          $region57: #{multi_head_attention.3} parent=55 // pred_check
            _
          $region58: #{multi_head_attention.3} parent=55 // pred_check_branch
            %578 = sbr.rel (0) target = $region60
          $region59: #{multi_head_attention.3} parent=55 // pred_region
            // Predicated region
            $region61: #{multi_head_attention.3} parent=59 // pred_check
              _
            $region62: #{multi_head_attention.3} parent=59 // pred_check_branch
              %580 = sbr.rel target = $region64
            $region63: #{multi_head_attention.3} parent=59 // pred_region
              // Predicated region
              $region76: #{multi_head_attention.3} parent=63 // pred_check
                _
              $region77: #{multi_head_attention.3} parent=63 // pred_check_branch
                %606 = sbr.rel (0) target = $region79
              $region78: #{multi_head_attention.3} parent=63 // pred_region
                loop: start=0, step=1, limit=1
                $region80: #{multi_head_attention.3} parent=78 // loop_pre_header
                  _
                $region81: #{multi_head_attention.3} parent=78 // loop_header
                  %s608 = sphi 0, %s612
                  %p609 = scmp.ge.s32.totalorder %s608, 1
                  %s613 = sphi %s570, %s570
                  %s614 = sphi %s576, %s576
                $region82: #{multi_head_attention.3} parent=78 // loop_header_branch
                  %611 = sbr.rel (%p609) target = $region86
                $region83: #{multi_head_attention.3} parent=78 // loop_body
                  _
                $region84: #{multi_head_attention.3} parent=78 // loop_footer
                  %s612 = sadd.s32 1, %s608
                $region85: #{multi_head_attention.3} parent=78 // loop_footer_branch
                  %607 = sbr.rel target = $region81
                $region86: #{multi_head_attention.3} parent=78 // loop_exit
                  _
                %s616 = ssub.s32 16, 1
                loop: start=0, step=1, limit=1
                $region87: #{multi_head_attention.3} parent=78 // loop_pre_header
                  _
                $region88: #{multi_head_attention.3} parent=78 // loop_header
                  %s618 = sphi 0, %s622
                  %p619 = scmp.ge.s32.totalorder %s618, 1
                  %s623 = sphi %s570, %s570
                  %s624 = sphi %s576, %s576
                $region89: #{multi_head_attention.3} parent=78 // loop_header_branch
                  %621 = sbr.rel (%p619) target = $region93
                $region90: #{multi_head_attention.3} parent=78 // loop_body
                  %v625 = vld [vmem:[%s623] sm:%s616]
                  %626 = vst [vmem:[%s624] sm:%s616] %v625
                  %v627 = vld [vmem:[%s623 + $0x4] sm:%s616]
                  %628 = vst [vmem:[%s624 + $0x4] sm:%s616] %v627
                  %v629 = vld [vmem:[%s623 + $0x8] sm:%s616]
                  %630 = vst [vmem:[%s624 + $0x10] sm:%s616] %v629
                  %v631 = vld [vmem:[%s623 + $0xc] sm:%s616]
                  %632 = vst [vmem:[%s624 + $0x14] sm:%s616] %v631
                  %v633 = vld [vmem:[%s623 + $0x10] sm:%s616]
                  %634 = vst [vmem:[%s624 + $0x20] sm:%s616] %v633
                  %v635 = vld [vmem:[%s623 + $0x14] sm:%s616]
                  %636 = vst [vmem:[%s624 + $0x24] sm:%s616] %v635
                $region91: #{multi_head_attention.3} parent=78 // loop_footer
                  %s622 = sadd.s32 1, %s618
                $region92: #{multi_head_attention.3} parent=78 // loop_footer_branch
                  %617 = sbr.rel target = $region88
                $region93: #{multi_head_attention.3} parent=78 // loop_exit
                  _
              $region79: #{multi_head_attention.3} parent=63 // pred_fallthru
                _
            $region64: #{multi_head_attention.3} parent=59 // pred_fallthru
              _
            // Predicated region
            $region65: #{multi_head_attention.3} parent=59 // pred_check
              _
            $region66: #{multi_head_attention.3} parent=59 // pred_check_branch
              %582 = sbr.rel (0) target = $region68
            $region67: #{multi_head_attention.3} parent=59 // pred_region
              %s584 = ssub.s32 16, 1
              loop: start=0, step=1, limit=1
              $region69: #{multi_head_attention.3} parent=67 // loop_pre_header
                _
              $region70: #{multi_head_attention.3} parent=67 // loop_header
                %s586 = sphi 0, %s590
                %p587 = scmp.ge.s32.totalorder %s586, 1
                %s591 = sphi %s570, %s570
                %s592 = sphi %s576, %s576
              $region71: #{multi_head_attention.3} parent=67 // loop_header_branch
                %589 = sbr.rel (%p587) target = $region75
              $region72: #{multi_head_attention.3} parent=67 // loop_body
                %v593 = vld [vmem:[%s591] sm:%s584]
                %594 = vst [vmem:[%s592] sm:%s584] %v593
                %v595 = vld [vmem:[%s591 + $0x4] sm:%s584]
                %596 = vst [vmem:[%s592 + $0x4] sm:%s584] %v595
                %v597 = vld [vmem:[%s591 + $0x8] sm:%s584]
                %598 = vst [vmem:[%s592 + $0x10] sm:%s584] %v597
                %v599 = vld [vmem:[%s591 + $0xc] sm:%s584]
                %600 = vst [vmem:[%s592 + $0x14] sm:%s584] %v599
                %v601 = vld [vmem:[%s591 + $0x10] sm:%s584]
                %602 = vst [vmem:[%s592 + $0x20] sm:%s584] %v601
                %v603 = vld [vmem:[%s591 + $0x14] sm:%s584]
                %604 = vst [vmem:[%s592 + $0x24] sm:%s584] %v603
              $region73: #{multi_head_attention.3} parent=67 // loop_footer
                %s590 = sadd.s32 1, %s586
              $region74: #{multi_head_attention.3} parent=67 // loop_footer_branch
                %585 = sbr.rel target = $region70
              $region75: #{multi_head_attention.3} parent=67 // loop_exit
                _
            $region68: #{multi_head_attention.3} parent=59 // pred_fallthru
              _
          $region60: #{multi_head_attention.3} parent=55 // pred_fallthru
            _
          %637 = vnop
        $region56: #{multi_head_attention.3} parent=39 // pred_fallthru
          _
      $region40: #{multi_head_attention.3} parent=5 // pred_fallthru
        _
      %p638 = scmp.le.s32.totalorder 2, %s17
      // Predicated region
      $region94: #{multi_head_attention.3} parent=5 // pred_check
        %p639 = pneg %p638
      $region95: #{multi_head_attention.3} parent=5 // pred_check_branch
        %641 = sbr.rel (%p639) target = $region97
      $region96: #{multi_head_attention.3} parent=5 // pred_region
        %s642 = ssub.s32 %s17, 2
        // Predicated region
        $region98: #{multi_head_attention.3} parent=96 // pred_check
          %p643 = pneg %p166
        $region99: #{multi_head_attention.3} parent=96 // pred_check_branch
          %645 = sbr.rel (%p643) target = $region101
        $region100: #{multi_head_attention.3} parent=96 // pred_region
          %s646 = sand.u32 %s151, 1
          %s647 = sand.u32 %s151, 1
          %s648 = smul.addr %s647, 24
          %s649 = scalar_lea.vmem [#allocation7], %s648
        $region101: #{multi_head_attention.3} parent=96 // pred_fallthru
          _
      $region97: #{multi_head_attention.3} parent=5 // pred_fallthru
        _
    $region6: #{multi_head_attention.3} parent=1 // loop_footer
      %s21 = sadd.s32 1, %s17
    $region7: #{multi_head_attention.3} parent=1 // loop_footer_branch
      %16 = sbr.rel target = $region3
    $region8: #{multi_head_attention.3} parent=1 // loop_exit
      _
    %650 = vsyncpa [#allocation3], 1
    %s651 = scalar_lea.sflag [#allocation3], 1
    %652 = vsyncpa %s651, 1
    %653 = vsyncpa [#allocation5], 1
    %s654 = scalar_lea.sflag [#allocation5], 1
    %655 = vsyncpa %s654, 1

// kernel: multi_head_attention.4
$region0: #{multi_head_attention.4}
  #allocation0 [shape = 'u32[]', space=smem, size = 0x4, offset = 0x4, fixed_abs, tag = 'smem constant byte address 0x4 - core index']
  #allocation1 [shape = 'u32[144,128]{1,0:T(1,128)}', space=vmem, size = 0x12000, scoped, tag = 'internal scratch']
  %s0 = inlined_call_operand.vmem [shape: bf16[3,2,4,16,8], index: 0, kind: input, shape index: {}]
  %s1 = inlined_call_operand.vmem [shape: bf16[2,16,16], index: 1, kind: input, shape index: {}]
  %s2 = inlined_call_operand.vmem [shape: bf16[2,4,16,8], index: 2, kind: output, shape index: {}]
  %s3 = sld [smem:[#allocation0]]
  $region82: #{multi_head_attention.4} parent=0
    _
  %s5 = ssub.s32 1, %s3
  %s6 = scalar_select 0, %s5, %s3
  $region1: #{multi_head_attention.4} parent=0
    #allocation2 [shape = 'u8[24576]{0}', space=vmem, size = 0x6000, scoped, tag = 'input window, operand 0']
    loop: start=0, step=1, limit=10
    $region2: #{multi_head_attention.4} parent=1 // loop_pre_header
      _
    $region3: #{multi_head_attention.4} parent=1 // loop_header
      %s8 = sphi 0, %s12
      %p9 = scmp.ge.s32.totalorder %s8, 10
      %s15 = sphi 0, %s27
      %s16 = sphi 0, %s23
      %s17 = sphi 0, %s15
      %s18 = sphi 0, %s16
      %s19 = sphi 0, %s17
      %s20 = sphi 0, %s18
      %s32 = sphi 0, %s34
      %s35 = sphi 0, %s32
      %s36 = sphi 0, %s35
      %s52 = sphi 0, %s36
      %s86 = sphi 0, %s88
      %s89 = sphi 0, %s86
      %s90 = sphi 0, %s89
      %s106 = sphi 0, %s90
      %s114 = sphi 0, %s116
      %s117 = sphi 0, %s114
      %s118 = sphi 0, %s117
      %s134 = sphi 0, %s118
    $region4: #{multi_head_attention.4} parent=1 // loop_header_branch
      %11 = sbr.rel (%p9) target = $region8
    $region5: #{multi_head_attention.4} parent=1 // loop_body
      %s13 = ssub.s32 %s8, 1
      %s14 = ssub.s32 %s8, 2
      %s21 = sadd.s32 1, %s16
      %p22 = scmp.ge.s32.totalorder %s21, 4
      %s23 = scalar_select %p22, 0, %s21
      %s24 = sadd.s32 1, %s15
      %s25 = scalar_select %p22, %s24, %s15
      %p26 = scmp.ge.s32.totalorder %s25, 2
      %s27 = scalar_select %p26, 0, %s25
      %s28 = ssub.s32 %s15, %s27
      %s29 = ssub.s32 %s16, %s23
      %s30 = sor.u32 %s28, %s29
      %p31 = scmp.eq.s32.totalorder %s30, 0
      %s33 = sadd.s32 %s32, 1
      %s34 = scalar_select %p31, %s32, %s33
      %p37 = pneg %p31
      %p38 = scmp.eq.s32.totalorder %s8, 7
      %p39 = por %p37, %p38
      %p40 = scmp.ne.s32.totalorder %s32, %s35
      %p41 = scmp.eq.s32.totalorder %s8, 0
      %p42 = por %p40, %p41
      %p43 = scmp.ne.s32.totalorder %s32, %s35
      %p44 = scmp.eq.s32.totalorder %s13, 7
      %p45 = por %p43, %p44
      %p46 = scmp.ne.s32.totalorder %s35, %s36
      %p47 = scmp.eq.s32.totalorder %s13, 0
      %p48 = por %p46, %p47
      %p49 = scmp.ne.s32.totalorder %s35, %s36
      %p50 = scmp.eq.s32.totalorder %s14, 7
      %p51 = por %p49, %p50
      %p53 = scmp.ne.s32.totalorder %s36, %s52
      %p54 = scmp.eq.s32.totalorder %s14, 0
      %p55 = por %p53, %p54
      %s56 = smul.u32 %s15, 4
      %s57 = sadd.s32 %s56, %s16
      %p58 = scmp.lt.s32.totalorder %s57, 0
      %s59 = ssub.s32 0, %s57
      %s60 = scalar_select %p58, %s59, %s57
      %s61 = sand.u32 %s60, 1
      %s62 = ssub.s32 0, %s61
      %s63 = scalar_select %p58, %s62, %s61
      %p64 = scmp.ne.s32.totalorder %s63, 0
      %p65 = scmp.lt.s32.totalorder %s63, 0
      %p66 = pnand %p65, %p64
      %p67 = pneg %p66
      %s68 = sadd.s32 %s63, 2
      %s69 = scalar_select %p67, %s68, %s63
      %s70 = smul.u32 %s27, 4
      %s71 = sadd.s32 %s70, %s23
      %p72 = scmp.lt.s32.totalorder %s71, 0
      %s73 = ssub.s32 0, %s71
      %s74 = scalar_select %p72, %s73, %s71
      %s75 = sand.u32 %s74, 1
      %s76 = ssub.s32 0, %s75
      %s77 = scalar_select %p72, %s76, %s75
      %p78 = scmp.ne.s32.totalorder %s77, 0
      %p79 = scmp.lt.s32.totalorder %s77, 0
      %p80 = pnand %p79, %p78
      %p81 = pneg %p80
      %s82 = sadd.s32 %s77, 2
      %s83 = scalar_select %p81, %s82, %s77
      %s84 = ssub.s32 %s69, %s83
      %p85 = scmp.eq.s32.totalorder %s84, 0
      %s87 = sadd.s32 %s86, 1
      %s88 = scalar_select %p85, %s86, %s87
      %p91 = pneg %p85
      %p92 = scmp.eq.s32.totalorder %s8, 7
      %p93 = por %p91, %p92
      %p94 = scmp.ne.s32.totalorder %s86, %s89
      %p95 = scmp.eq.s32.totalorder %s8, 0
      %p96 = por %p94, %p95
      %p97 = scmp.ne.s32.totalorder %s86, %s89
      %p98 = scmp.eq.s32.totalorder %s13, 7
      %p99 = por %p97, %p98
      %p100 = scmp.ne.s32.totalorder %s89, %s90
      %p101 = scmp.eq.s32.totalorder %s13, 0
      %p102 = por %p100, %p101
      %p103 = scmp.ne.s32.totalorder %s89, %s90
      %p104 = scmp.eq.s32.totalorder %s14, 7
      %p105 = por %p103, %p104
      %p107 = scmp.ne.s32.totalorder %s90, %s106
      %p108 = scmp.eq.s32.totalorder %s14, 0
      %p109 = por %p107, %p108
      %s110 = ssub.s32 %s15, %s27
      %s111 = ssub.s32 %s16, %s23
      %s112 = sor.u32 %s110, %s111
      %p113 = scmp.eq.s32.totalorder %s112, 0
      %s115 = sadd.s32 %s114, 1
      %s116 = scalar_select %p113, %s114, %s115
      %p119 = pneg %p113
      %p120 = scmp.eq.s32.totalorder %s8, 7
      %p121 = por %p119, %p120
      %p122 = scmp.ne.s32.totalorder %s114, %s117
      %p123 = scmp.eq.s32.totalorder %s8, 0
      %p124 = por %p122, %p123
      %p125 = scmp.ne.s32.totalorder %s114, %s117
      %p126 = scmp.eq.s32.totalorder %s13, 7
      %p127 = por %p125, %p126
      %p128 = scmp.ne.s32.totalorder %s117, %s118
      %p129 = scmp.eq.s32.totalorder %s13, 0
      %p130 = por %p128, %p129
      %p131 = scmp.ne.s32.totalorder %s117, %s118
      %p132 = scmp.eq.s32.totalorder %s14, 7
      %p133 = por %p131, %p132
      %p135 = scmp.ne.s32.totalorder %s118, %s134
      %p136 = scmp.eq.s32.totalorder %s14, 0
      %p137 = por %p135, %p136
      %p138 = scmp.le.s32.totalorder 1, %s8
      %p139 = scmp.lt.s32.totalorder %s8, 9
      %p140 = pnand %p138, %p139
      %p141 = pneg %p140
      // Predicated region
      $region9: #{multi_head_attention.4} parent=5 // pred_check
        _
      $region10: #{multi_head_attention.4} parent=5 // pred_check_branch
        %143 = sbr.rel (%p140) target = $region12
      $region11: #{multi_head_attention.4} parent=5 // pred_region
        %s144 = ssub.s32 %s8, 1
      $region12: #{multi_head_attention.4} parent=5 // pred_fallthru
        _
      %p145 = scmp.lt.s32.totalorder %s8, 8
      // Predicated region
      $region13: #{multi_head_attention.4} parent=5 // pred_check
        %p146 = pneg %p145
      $region14: #{multi_head_attention.4} parent=5 // pred_check_branch
        %148 = sbr.rel (%p146) target = $region16
      $region15: #{multi_head_attention.4} parent=5 // pred_region
        // Predicated region
        $region17: #{multi_head_attention.4} parent=15 // pred_check
          %p149 = pneg %p42
        $region18: #{multi_head_attention.4} parent=15 // pred_check_branch
          %151 = sbr.rel (%p149) target = $region20
        $region19: #{multi_head_attention.4} parent=15 // pred_region
          %s152 = sand.u32 %s32, 1
          %s153 = sand.u32 %s32, 1
          %s154 = smul.addr %s153, 24
          %s155 = scalar_lea.vmem [#allocation2], %s154
          %s156 = smul.addr %s16, 2
          %s157 = smul.addr %s15, 8
          %s158 = sadd.s32 %s156, %s157
          %s159 = smul.addr %s158, 4
          %s160 = scalar_lea.vmem %s0, %s159
          // Predicated region
          $region21: #{multi_head_attention.4} parent=19 // pred_check
            _
          $region22: #{multi_head_attention.4} parent=19 // pred_check_branch
            %162 = sbr.rel (0) target = $region24
          $region23: #{multi_head_attention.4} parent=19 // pred_region
            // Predicated region
            $region25: #{multi_head_attention.4} parent=23 // pred_check
              _
            $region26: #{multi_head_attention.4} parent=23 // pred_check_branch
              %164 = sbr.rel target = $region28
            $region27: #{multi_head_attention.4} parent=23 // pred_region
              // Predicated region
              $region40: #{multi_head_attention.4} parent=27 // pred_check
                _
              $region41: #{multi_head_attention.4} parent=27 // pred_check_branch
                %190 = sbr.rel (0) target = $region43
              $region42: #{multi_head_attention.4} parent=27 // pred_region
                loop: start=0, step=1, limit=1
                $region44: #{multi_head_attention.4} parent=42 // loop_pre_header
                  _
                $region45: #{multi_head_attention.4} parent=42 // loop_header
                  %s192 = sphi 0, %s196
                  %p193 = scmp.ge.s32.totalorder %s192, 1
                  %s197 = sphi %s160, %s160
                  %s198 = sphi %s155, %s155
                $region46: #{multi_head_attention.4} parent=42 // loop_header_branch
                  %195 = sbr.rel (%p193) target = $region50
                $region47: #{multi_head_attention.4} parent=42 // loop_body
                  _
                $region48: #{multi_head_attention.4} parent=42 // loop_footer
                  %s196 = sadd.s32 1, %s192
                $region49: #{multi_head_attention.4} parent=42 // loop_footer_branch
                  %191 = sbr.rel target = $region45
                $region50: #{multi_head_attention.4} parent=42 // loop_exit
                  _
                %s200 = ssub.s32 16, 1
                loop: start=0, step=1, limit=1
                $region51: #{multi_head_attention.4} parent=42 // loop_pre_header
                  _
                $region52: #{multi_head_attention.4} parent=42 // loop_header
                  %s202 = sphi 0, %s206
                  %p203 = scmp.ge.s32.totalorder %s202, 1
                  %s207 = sphi %s160, %s160
                  %s208 = sphi %s155, %s155
                $region53: #{multi_head_attention.4} parent=42 // loop_header_branch
                  %205 = sbr.rel (%p203) target = $region57
                $region54: #{multi_head_attention.4} parent=42 // loop_body
                  %v209 = vld [vmem:[%s207] sm:%s200]
                  %210 = vst [vmem:[%s208] sm:%s200] %v209
                  %v211 = vld [vmem:[%s207 + $0x4] sm:%s200]
                  %212 = vst [vmem:[%s208 + $0x4] sm:%s200] %v211
                  %v213 = vld [vmem:[%s207 + $0x40] sm:%s200]
                  %214 = vst [vmem:[%s208 + $0x8] sm:%s200] %v213
                  %v215 = vld [vmem:[%s207 + $0x44] sm:%s200]
                  %216 = vst [vmem:[%s208 + $0xc] sm:%s200] %v215
                  %v217 = vld [vmem:[%s207 + $0x80] sm:%s200]
                  %218 = vst [vmem:[%s208 + $0x10] sm:%s200] %v217
                  %v219 = vld [vmem:[%s207 + $0x84] sm:%s200]
                  %220 = vst [vmem:[%s208 + $0x14] sm:%s200] %v219
                $region55: #{multi_head_attention.4} parent=42 // loop_footer
                  %s206 = sadd.s32 1, %s202
                $region56: #{multi_head_attention.4} parent=42 // loop_footer_branch
                  %201 = sbr.rel target = $region52
                $region57: #{multi_head_attention.4} parent=42 // loop_exit
                  _
              $region43: #{multi_head_attention.4} parent=27 // pred_fallthru
                _
            $region28: #{multi_head_attention.4} parent=23 // pred_fallthru
              _
            // Predicated region
            $region29: #{multi_head_attention.4} parent=23 // pred_check
              _
            $region30: #{multi_head_attention.4} parent=23 // pred_check_branch
              %166 = sbr.rel (0) target = $region32
            $region31: #{multi_head_attention.4} parent=23 // pred_region
              %s168 = ssub.s32 16, 1
              loop: start=0, step=1, limit=1
              $region33: #{multi_head_attention.4} parent=31 // loop_pre_header
                _
              $region34: #{multi_head_attention.4} parent=31 // loop_header
                %s170 = sphi 0, %s174
                %p171 = scmp.ge.s32.totalorder %s170, 1
                %s175 = sphi %s160, %s160
                %s176 = sphi %s155, %s155
              $region35: #{multi_head_attention.4} parent=31 // loop_header_branch
                %173 = sbr.rel (%p171) target = $region39
              $region36: #{multi_head_attention.4} parent=31 // loop_body
                %v177 = vld [vmem:[%s175] sm:%s168]
                %178 = vst [vmem:[%s176] sm:%s168] %v177
                %v179 = vld [vmem:[%s175 + $0x4] sm:%s168]
                %180 = vst [vmem:[%s176 + $0x4] sm:%s168] %v179
                %v181 = vld [vmem:[%s175 + $0x40] sm:%s168]
                %182 = vst [vmem:[%s176 + $0x8] sm:%s168] %v181
                %v183 = vld [vmem:[%s175 + $0x44] sm:%s168]
                %184 = vst [vmem:[%s176 + $0xc] sm:%s168] %v183
                %v185 = vld [vmem:[%s175 + $0x80] sm:%s168]
                %186 = vst [vmem:[%s176 + $0x10] sm:%s168] %v185
                %v187 = vld [vmem:[%s175 + $0x84] sm:%s168]
                %188 = vst [vmem:[%s176 + $0x14] sm:%s168] %v187
              $region37: #{multi_head_attention.4} parent=31 // loop_footer
                %s174 = sadd.s32 1, %s170
              $region38: #{multi_head_attention.4} parent=31 // loop_footer_branch
                %169 = sbr.rel target = $region34
              $region39: #{multi_head_attention.4} parent=31 // loop_exit
                _
            $region32: #{multi_head_attention.4} parent=23 // pred_fallthru
              _
          $region24: #{multi_head_attention.4} parent=19 // pred_fallthru
            _
          %221 = vnop
        $region20: #{multi_head_attention.4} parent=15 // pred_fallthru
          _
        // Predicated region
        $region58: #{multi_head_attention.4} parent=15 // pred_check
          %p222 = pneg %p96
        $region59: #{multi_head_attention.4} parent=15 // pred_check_branch
          %224 = sbr.rel (%p222) target = $region61
        $region60: #{multi_head_attention.4} parent=15 // pred_region
          %s225 = smul.u32 %s15, 4
          %s226 = sadd.s32 %s225, %s16
          %p227 = scmp.lt.s32.totalorder %s226, 0
          %s228 = ssub.s32 0, %s226
          %s229 = scalar_select %p227, %s228, %s226
          %s230 = sand.u32 %s229, 1
          %s231 = ssub.s32 0, %s230
          %s232 = scalar_select %p227, %s231, %s230
          %p233 = scmp.ne.s32.totalorder %s232, 0
          %p234 = scmp.lt.s32.totalorder %s232, 0
          %p235 = pnand %p234, %p233
          %p236 = pneg %p235
          %s237 = sadd.s32 %s232, 2
          %s238 = scalar_select %p236, %s237, %s232
          %p239 = scmp.lt.s32.totalorder %s238, 1
          %s240 = scalar_select %p239, %s238, 1
          %s241 = smul.addr %s240, 2
          %s242 = smul.addr %s241, 4
          %s243 = scalar_lea.vmem %s1, %s242
          %s244 = smul.u32 %s15, 4
          %s245 = sadd.s32 %s244, %s16
          %p246 = scmp.lt.s32.totalorder %s245, 0
          %s247 = ssub.s32 0, %s245
          %s248 = scalar_select %p246, %s247, %s245
          %s249 = sand.u32 %s248, 1
          %s250 = ssub.s32 0, %s249
          %s251 = scalar_select %p246, %s250, %s249
          %p252 = scmp.ne.s32.totalorder %s251, 0
          %p253 = scmp.lt.s32.totalorder %s251, 0
          %p254 = pnand %p253, %p252
          %p255 = pneg %p254
          %s256 = sadd.s32 %s251, 2
          %s257 = scalar_select %p255, %s256, %s251
        $region61: #{multi_head_attention.4} parent=15 // pred_fallthru
          _
      $region16: #{multi_head_attention.4} parent=5 // pred_fallthru
        _
      %p258 = scmp.le.s32.totalorder 1, %s8
      %p259 = scmp.lt.s32.totalorder %s8, 9
      %p260 = pnand %p258, %p259
      %p261 = pneg %p260
      // Predicated region
      $region62: #{multi_head_attention.4} parent=5 // pred_check
        _
      $region63: #{multi_head_attention.4} parent=5 // pred_check_branch
        %263 = sbr.rel (%p260) target = $region65
      $region64: #{multi_head_attention.4} parent=5 // pred_region
        %s264 = ssub.s32 %s8, 1
        %s265 = sand.u32 %s35, 1
        %s266 = sand.u32 %s35, 1
        %s267 = smul.addr %s266, 24
        %s268 = scalar_lea.vmem [#allocation2], %s267
        // Predicated region
        $region66: #{multi_head_attention.4} parent=64 // pred_check
          %p269 = pneg %p48
        $region67: #{multi_head_attention.4} parent=64 // pred_check_branch
          %271 = sbr.rel (%p269) target = $region69
        $region68: #{multi_head_attention.4} parent=64 // pred_region
          _
        $region69: #{multi_head_attention.4} parent=64 // pred_fallthru
          _
        %s272 = sand.u32 %s35, 1
        %s273 = sand.u32 %s35, 1
        %s274 = smul.addr %s273, 24
        %s275 = scalar_lea.vmem [#allocation2], %s274
        %p276 = pneg %p48
        %p277 = pneg %p45
        %s278 = smul.u32 %s17, 4
        %s279 = sadd.s32 %s278, %s18
        %p280 = scmp.lt.s32.totalorder %s279, 0
        %s281 = ssub.s32 0, %s279
        %s282 = scalar_select %p280, %s281, %s279
        %s283 = sand.u32 %s282, 1
        %s284 = ssub.s32 0, %s283
        %s285 = scalar_select %p280, %s284, %s283
        %p286 = scmp.ne.s32.totalorder %s285, 0
        %p287 = scmp.lt.s32.totalorder %s285, 0
        %p288 = pnand %p287, %p286
        %p289 = pneg %p288
        %s290 = sadd.s32 %s285, 2
        %s291 = scalar_select %p289, %s290, %s285
        %p292 = scmp.lt.s32.totalorder %s291, 1
        %s293 = scalar_select %p292, %s291, 1
        %s294 = smul.addr %s293, 2
        %s295 = smul.addr %s294, 4
        %s296 = scalar_lea.vmem %s1, %s295
        %p297 = pneg %p102
        %p298 = pneg %p99
        %p299 = pneg %p130
        %p300 = pneg %p127
        %p301 = scmp.lt.s32.totalorder %s17, 1
        %s302 = scalar_select %p301, %s17, 1
        %p303 = scmp.lt.s32.totalorder %s18, 3
        %s304 = scalar_select %p303, %s18, 3
        %s305 = smul.addr %s304, 2
        %s306 = smul.addr %s302, 8
        %s307 = sadd.s32 %s305, %s306
        %s308 = smul.addr %s307, 4
        %s309 = scalar_lea.vmem %s2, %s308
        %s310 = smul.u32 %s17, 4
        %s311 = sadd.s32 %s310, %s18
        %p312 = scmp.lt.s32.totalorder %s311, 0
        %s313 = ssub.s32 0, %s311
        %s314 = scalar_select %p312, %s313, %s311
        %s315 = sand.u32 %s314, 1
        %s316 = ssub.s32 0, %s315
        %s317 = scalar_select %p312, %s316, %s315
        %p318 = scmp.ne.s32.totalorder %s317, 0
        %p319 = scmp.lt.s32.totalorder %s317, 0
        %p320 = pnand %p319, %p318
        %p321 = pneg %p320
        %s322 = sadd.s32 %s317, 2
        %s323 = scalar_select %p321, %s322, %s317
        %p324 = scmp.lt.s32.totalorder %s323, 1
        %s325 = scalar_select %p324, %s323, 1
        %s326 = smul.addr %s325, 2
        %s327 = smul.addr %s326, 4
        %s328 = scalar_lea.vmem %s1, %s327
        %s329 = smul.u32 %s17, 4
        %s330 = sadd.s32 %s329, %s18
        %p331 = scmp.lt.s32.totalorder %s330, 0
        %s332 = ssub.s32 0, %s330
        %s333 = scalar_select %p331, %s332, %s330
        %s334 = sand.u32 %s333, 1
        %s335 = ssub.s32 0, %s334
        %s336 = scalar_select %p331, %s335, %s334
        %p337 = scmp.ne.s32.totalorder %s336, 0
        %p338 = scmp.lt.s32.totalorder %s336, 0
        %p339 = pnand %p338, %p337
        %p340 = pneg %p339
        %s341 = sadd.s32 %s336, 2
        %s342 = scalar_select %p340, %s341, %s336
        %p343 = scmp.lt.s32.totalorder %s17, 1
        %s344 = scalar_select %p343, %s17, 1
        %p345 = scmp.lt.s32.totalorder %s18, 3
        %s346 = scalar_select %p345, %s18, 3
        %s347 = smul.addr %s346, 2
        %s348 = smul.addr %s344, 8
        %s349 = sadd.s32 %s347, %s348
        %s350 = smul.addr %s349, 4
        %s351 = scalar_lea.vmem %s2, %s350
        %v355 = vld [vmem:[%s268] sm:$0xf]
        %v356 = vld [vmem:[%s268 + $0x4] sm:$0xf]
        %s357 = scalar_lea.vmem %s268, 8 [#allocation2]
        %v358 = vld [vmem:[%s357] sm:$0xf]
        %v359 = vld [vmem:[%s357 + $0x4] sm:$0xf]
        %s360 = scalar_lea.vmem %s268, 16 [#allocation2]
        %v361 = vld [vmem:[%s360] sm:$0xf]
        %v362 = vld [vmem:[%s360 + $0x4] sm:$0xf]
        %v365 = vunpack.c.l.b16 %v355
        %v366 = vunpack.c.l.b16 %v356
        %v367 = vpack.c.b16 %v366, %v365
        %v370 = vunpack.c.l.b16 %v358
        %v371 = vunpack.c.l.b16 %v359
        %v372 = vpack.c.b16 %v371, %v370
        %vm373 = vcmask 64512
        %v375 = vsel %vm373, %v367, 0
        %v378 = vsel %vm373, %v372, 0
        %380 = vmatprep.subr.bf16.mxu0 0
        %381 = vmatpush1.bf16.xpose.msra.mxu0 0
        %382 = vmatprep.subr.bf16.mxu0 0
        %383 = vmatpush1.bf16.xpose.msra.mxu0 0
        %384 = vmatprep.subr.bf16.mxu0 0
        %385 = vmatpush1.bf16.xpose.msra.mxu0 0
        %386 = vmatprep.subr.bf16.mxu0 0
        %387 = vmatpush1.bf16.xpose.msra.mxu0 0
        %388 = vmatprep.subr.bf16.mxu0 0
        %389 = vmatpush1.bf16.xpose.msra.mxu0 0
        %390 = vmatprep.subr.bf16.mxu0 0
        %391 = vmatpush1.bf16.xpose.msra.mxu0 0
        %392 = vmatprep.subr.bf16.mxu0 0
        %393 = vmatpush1.bf16.xpose.msra.mxu0 0
        %394 = vmatprep.subr.bf16.mxu0 0
        %395 = vmatpush1.bf16.xpose.msra.mxu0 %v378
        %396 = vmatprep.subr.bf16.mxu0 0
        %397 = vmatpush2.bf16.xpose.msra.mxu0 0
        %398 = vmatprep.subr.bf16.mxu0 0
        %399 = vmatpush2.bf16.xpose.msra.mxu0 0
        %400 = vmatprep.subr.bf16.mxu0 0
        %401 = vmatpush2.bf16.xpose.msra.mxu0 0
        %402 = vmatprep.subr.bf16.mxu0 0
        %403 = vmatpush2.bf16.xpose.msra.mxu0 0
        %404 = vmatprep.subr.bf16.mxu0 0
        %405 = vmatpush2.bf16.xpose.msra.mxu0 0
        %406 = vmatprep.subr.bf16.mxu0 0
        %407 = vmatpush2.bf16.xpose.msra.mxu0 0
        %408 = vmatprep.subr.bf16.mxu0 0
        %409 = vmatpush2.bf16.xpose.msra.mxu0 0
        %410 = vmatprep.subr.bf16.mxu0 0
        %411 = vmatpush2.bf16.xpose.msra.mxu0 0
        %412 = vmatprep.mubr.bf16.mxu0 0
        %413 = vmatmul.mubr.bf16.gmra.mxu0 %v375
        %v414 = vpop.f32.mrf.mxu0
        %v415 = vadd.f32 0.0, %v414
        %v416 = vpop.f32.mrf.mxu0
        %v417 = vpop.f32.mrf.mxu0
        %v418 = vadd.f32 0.0, %v417
        %v419 = vpop.f32.mrf.mxu0
        %420 = vdwg.mxu0
        %v421 = vmul.f32 %v415, 0.35355338
        %v422 = vmul.f32 %v418, 0.35355338
        %v423 = vld [vmem:[%s328] sm:$0xf]
        %v424 = vld [vmem:[%s328 + $0x4] sm:$0xf]
        %vm425 = vcmp.ne.bf16.partialorder %v423, 0
        %vm426 = vcmp.ne.bf16.partialorder %v424, 0
        %v427 = vsel %vm425, 65537, 0
        %v428 = vsel %vm426, 65537, 0
        %v429 = vunpack.c.l.b16 %v427
        %v430 = vunpack.c.l.b16 %v428
        %vm431 = vcmp.ne.s32.totalorder %v429, 0
        %vm432 = vcmp.ne.s32.totalorder %v430, 0
        %v433 = vsel %vm431, -1e+30, %v421
        %v434 = vsel %vm432, -1e+30, %v422
        %vm435 = vcmask 130048
        %v436 = vsel %vm435, %v433, -inf
        %437 = vmax.xlane.f32.xlu0 %v436
        %v438 = vpop.xlane.xlu0 %437
        %v439 = vsel %vm435, %v434, -inf
        %440 = vmax.xlane.f32.xlu0 %v439
        %v441 = vpop.xlane.xlu0 %440
        %v442 = vsub.f32 %v433, %v438
        %v443 = vsub.f32 %v434, %v441
        %v444 = vmul.f32 %v442, 1.442695
        %v445 = vpow.pop %v444
        %v446 = vmul.f32 %v443, 1.442695
        %v447 = vpow.pop %v446
        %v448 = vsel %vm435, %v445, 0.0
        %449 = vadd.xlane.f32.xlu0 %v448
        %v450 = vpop.xlane.xlu0 %449
        %v451 = vsel %vm435, %v447, 0.0
        %452 = vadd.xlane.f32.xlu0 %v451
        %v453 = vpop.xlane.xlu0 %452
        %v454 = vrcp.pop %v450
        %v455 = vrcp.pop %v453
        %v456 = vmul.f32 %v445, %v454
        %v457 = vmul.f32 %v447, %v455
        %v458 = vpack.c.bf16 %v457, %v456
        %v461 = vunpack.c.l.b16 %v361
        %v462 = vunpack.c.l.b16 %v362
        %v463 = vpack.c.b16 %v462, %v461
        %v466 = vsel %vm435, %v458, 0
        %468 = vmatprep.subr.bf16.mxu0 0
        %469 = vmatpush1.bf16.msra.mxu0 0
        %470 = vmatprep.subr.bf16.mxu0 0
        %471 = vmatpush1.bf16.msra.mxu0 0
        %472 = vmatprep.subr.bf16.mxu0 0
        %473 = vmatpush1.bf16.msra.mxu0 0
        %474 = vmatprep.subr.bf16.mxu0 0
        %475 = vmatpush1.bf16.msra.mxu0 0
        %476 = vmatprep.subr.bf16.mxu0 0
        %477 = vmatpush1.bf16.msra.mxu0 0
        %478 = vmatprep.subr.bf16.mxu0 0
        %479 = vmatpush1.bf16.msra.mxu0 0
        %480 = vmatprep.subr.bf16.mxu0 0
        %481 = vmatpush1.bf16.msra.mxu0 0
        %482 = vmatprep.subr.bf16.mxu0 0
        %483 = vmatpush1.bf16.msra.mxu0 %v463
        %484 = vmatprep.subr.bf16.mxu0 0
        %485 = vmatpush2.bf16.msra.mxu0 0
        %486 = vmatprep.subr.bf16.mxu0 0
        %487 = vmatpush2.bf16.msra.mxu0 0
        %488 = vmatprep.subr.bf16.mxu0 0
        %489 = vmatpush2.bf16.msra.mxu0 0
        %490 = vmatprep.subr.bf16.mxu0 0
        %491 = vmatpush2.bf16.msra.mxu0 0
        %492 = vmatprep.subr.bf16.mxu0 0
        %493 = vmatpush2.bf16.msra.mxu0 0
        %494 = vmatprep.subr.bf16.mxu0 0
        %495 = vmatpush2.bf16.msra.mxu0 0
        %496 = vmatprep.subr.bf16.mxu0 0
        %497 = vmatpush2.bf16.msra.mxu0 0
        %498 = vmatprep.subr.bf16.mxu0 0
        %499 = vmatpush2.bf16.msra.mxu0 0
        %500 = vmatprep.mubr.bf16.mxu0 0
        %501 = vmatmul.mubr.bf16.gmra.mxu0 %v466
        %v502 = vpop.f32.mrf.mxu0
        %v503 = vadd.f32 0.0, %v502
        %v504 = vpop.f32.mrf.mxu0
        %v505 = vpop.f32.mrf.mxu0
        %v506 = vadd.f32 0.0, %v505
        %v507 = vpop.f32.mrf.mxu0
        %508 = vdwg.mxu0
        %v509 = vpack.c.bf16 %v506, %v503
        %v511 = vunpack.c.l.b16 %v509
        %v512 = vunpack.c.h.b16 %v509
        %v513 = vpack.c.b16 %v511, %v511
        %v514 = vpack.c.b16 %v512, %v512
        %vm517 = vcmask 60416
        %518 = vst.msk [vmem:[%s351] sm:$0xf] %vm517, %v513
        %519 = vst.msk [vmem:[%s351 + $0x4] sm:$0xf] %vm517, %v514
        %p520 = scmp.lt.s32.totalorder %s17, 1
        %s521 = scalar_select %p520, %s17, 1
        %p522 = scmp.lt.s32.totalorder %s18, 3
        %s523 = scalar_select %p522, %s18, 3
        %s524 = smul.addr %s523, 2
        %s525 = smul.addr %s521, 8
        %s526 = sadd.s32 %s524, %s525
        %s527 = smul.addr %s526, 4
        %s528 = scalar_lea.vmem %s2, %s527
        // Predicated region
        $region70: #{multi_head_attention.4} parent=64 // pred_check
          %p529 = pneg %p127
        $region71: #{multi_head_attention.4} parent=64 // pred_check_branch
          %531 = sbr.rel (%p529) target = $region73
        $region72: #{multi_head_attention.4} parent=64 // pred_region
          _
        $region73: #{multi_head_attention.4} parent=64 // pred_fallthru
          _
      $region65: #{multi_head_attention.4} parent=5 // pred_fallthru
        _
      %p532 = scmp.le.s32.totalorder 2, %s8
      // Predicated region
      $region74: #{multi_head_attention.4} parent=5 // pred_check
        %p533 = pneg %p532
      $region75: #{multi_head_attention.4} parent=5 // pred_check_branch
        %535 = sbr.rel (%p533) target = $region77
      $region76: #{multi_head_attention.4} parent=5 // pred_region
        %s536 = ssub.s32 %s8, 2
        // Predicated region
        $region78: #{multi_head_attention.4} parent=76 // pred_check
          %p537 = pneg %p133
        $region79: #{multi_head_attention.4} parent=76 // pred_check_branch
          %539 = sbr.rel (%p537) target = $region81
        $region80: #{multi_head_attention.4} parent=76 // pred_region
          %p540 = scmp.lt.s32.totalorder %s19, 1
          %s541 = scalar_select %p540, %s19, 1
          %p542 = scmp.lt.s32.totalorder %s20, 3
          %s543 = scalar_select %p542, %s20, 3
          %s544 = smul.addr %s543, 2
          %s545 = smul.addr %s541, 8
          %s546 = sadd.s32 %s544, %s545
          %s547 = smul.addr %s546, 4
          %s548 = scalar_lea.vmem %s2, %s547
        $region81: #{multi_head_attention.4} parent=76 // pred_fallthru
          _
      $region77: #{multi_head_attention.4} parent=5 // pred_fallthru
        _
    $region6: #{multi_head_attention.4} parent=1 // loop_footer
      %s12 = sadd.s32 1, %s8
    $region7: #{multi_head_attention.4} parent=1 // loop_footer_branch
      %7 = sbr.rel target = $region3
    $region8: #{multi_head_attention.4} parent=1 // loop_exit
      _

// kernel: multi_head_attention.5
$region0: #{multi_head_attention.5}
  #allocation0 [shape = 'u32[]', space=smem, size = 0x4, offset = 0x4, fixed_abs, tag = 'smem constant byte address 0x4 - core index']
  #allocation1 [shape = 'u32[144,128]{1,0:T(1,128)}', space=vmem, size = 0x12000, scoped, tag = 'internal scratch']
  %s0 = inlined_call_operand.vmem [shape: bf16[32,32], index: 0, kind: input, shape index: {}]
  %s1 = inlined_call_operand.vmem [shape: f32[32,32], index: 1, kind: input, shape index: {}]
  %s2 = inlined_call_operand.vmem [shape: bf16[32,32], index: 2, kind: input, shape index: {}]
  %s3 = inlined_call_operand.vmem [shape: f32[3,1,32], index: 3, kind: input, shape index: {}]
  %s4 = inlined_call_operand.hbm [shape: f32[32,32], index: 4, kind: output, shape index: {}]
  %s5 = sld [smem:[#allocation0]]
  $region49: #{multi_head_attention.5} parent=0
    _
  %s7 = ssub.s32 1, %s5
  %s8 = scalar_select 0, %s7, %s5
  $region1: #{multi_head_attention.5} parent=0
    #allocation2 [shape = 'u8[16384]{0}', space=vmem, size = 0x4000, scoped, tag = 'output window, operand 0']
    #allocation3 [shape = 's32[2]{0}', space=sflag, size = 0x8, scoped, tag = 'scoped memory for multi_head_attention.5']
    %9 = vsyncpa [#allocation3], 0
    %s10 = scalar_lea.sflag [#allocation3], 1
    %11 = vsyncpa %s10, 0
    loop: start=0, step=1, limit=4
    $region2: #{multi_head_attention.5} parent=1 // loop_pre_header
      _
    $region3: #{multi_head_attention.5} parent=1 // loop_header
      %s13 = sphi 0, %s17
      %p14 = scmp.ge.s32.totalorder %s13, 4
      %s23 = sphi 0, %s25
      %s26 = sphi 0, %s23
      %s27 = sphi 0, %s26
      %s43 = sphi 0, %s27
      %s49 = sphi 0, %s51
      %s52 = sphi 0, %s49
      %s53 = sphi 0, %s52
      %s69 = sphi 0, %s53
      %s73 = sphi 0, %s73
      %s75 = sphi 0, %s73
      %s76 = sphi 0, %s75
      %s90 = sphi 0, %s76
      %s94 = sphi 0, %s94
      %s96 = sphi 0, %s94
      %s97 = sphi 0, %s96
      %s111 = sphi 0, %s97
      %s117 = sphi 0, %s119
      %s120 = sphi 0, %s117
      %s121 = sphi 0, %s120
      %s137 = sphi 0, %s121
    $region4: #{multi_head_attention.5} parent=1 // loop_header_branch
      %16 = sbr.rel (%p14) target = $region8
    $region5: #{multi_head_attention.5} parent=1 // loop_body
      %s18 = ssub.s32 %s13, 1
      %s19 = ssub.s32 %s13, 2
      %s20 = sadd.s32 %s13, 1
      %s21 = ssub.s32 %s13, %s20
      %p22 = scmp.eq.s32.totalorder %s21, 0
      %s24 = sadd.s32 %s23, 1
      %s25 = scalar_select %p22, %s23, %s24
      %p28 = pneg %p22
      %p29 = scmp.eq.s32.totalorder %s13, 1
      %p30 = por %p28, %p29
      %p31 = scmp.ne.s32.totalorder %s23, %s26
      %p32 = scmp.eq.s32.totalorder %s13, 0
      %p33 = por %p31, %p32
      %p34 = scmp.ne.s32.totalorder %s23, %s26
      %p35 = scmp.eq.s32.totalorder %s18, 1
      %p36 = por %p34, %p35
      %p37 = scmp.ne.s32.totalorder %s26, %s27
      %p38 = scmp.eq.s32.totalorder %s18, 0
      %p39 = por %p37, %p38
      %p40 = scmp.ne.s32.totalorder %s26, %s27
      %p41 = scmp.eq.s32.totalorder %s19, 1
      %p42 = por %p40, %p41
      %p44 = scmp.ne.s32.totalorder %s27, %s43
      %p45 = scmp.eq.s32.totalorder %s19, 0
      %p46 = por %p44, %p45
      %s47 = ssub.s32 %s13, %s20
      %p48 = scmp.eq.s32.totalorder %s47, 0
      %s50 = sadd.s32 %s49, 1
      %s51 = scalar_select %p48, %s49, %s50
      %p54 = pneg %p48
      %p55 = scmp.eq.s32.totalorder %s13, 1
      %p56 = por %p54, %p55
      %p57 = scmp.ne.s32.totalorder %s49, %s52
      %p58 = scmp.eq.s32.totalorder %s13, 0
      %p59 = por %p57, %p58
      %p60 = scmp.ne.s32.totalorder %s49, %s52
      %p61 = scmp.eq.s32.totalorder %s18, 1
      %p62 = por %p60, %p61
      %p63 = scmp.ne.s32.totalorder %s52, %s53
      %p64 = scmp.eq.s32.totalorder %s18, 0
      %p65 = por %p63, %p64
      %p66 = scmp.ne.s32.totalorder %s52, %s53
      %p67 = scmp.eq.s32.totalorder %s19, 1
      %p68 = por %p66, %p67
      %p70 = scmp.ne.s32.totalorder %s53, %s69
      %p71 = scmp.eq.s32.totalorder %s19, 0
      %p72 = por %p70, %p71
      %s74 = sadd.s32 %s73, 1
      %p77 = scmp.eq.s32.totalorder %s13, 1
      %p78 = scmp.ne.s32.totalorder %s73, %s75
      %p79 = scmp.eq.s32.totalorder %s13, 0
      %p80 = por %p78, %p79
      %p81 = scmp.ne.s32.totalorder %s73, %s75
      %p82 = scmp.eq.s32.totalorder %s18, 1
      %p83 = por %p81, %p82
      %p84 = scmp.ne.s32.totalorder %s75, %s76
      %p85 = scmp.eq.s32.totalorder %s18, 0
      %p86 = por %p84, %p85
      %p87 = scmp.ne.s32.totalorder %s75, %s76
      %p88 = scmp.eq.s32.totalorder %s19, 1
      %p89 = por %p87, %p88
      %p91 = scmp.ne.s32.totalorder %s76, %s90
      %p92 = scmp.eq.s32.totalorder %s19, 0
      %p93 = por %p91, %p92
      %s95 = sadd.s32 %s94, 1
      %p98 = scmp.eq.s32.totalorder %s13, 1
      %p99 = scmp.ne.s32.totalorder %s94, %s96
      %p100 = scmp.eq.s32.totalorder %s13, 0
      %p101 = por %p99, %p100
      %p102 = scmp.ne.s32.totalorder %s94, %s96
      %p103 = scmp.eq.s32.totalorder %s18, 1
      %p104 = por %p102, %p103
      %p105 = scmp.ne.s32.totalorder %s96, %s97
      %p106 = scmp.eq.s32.totalorder %s18, 0
      %p107 = por %p105, %p106
      %p108 = scmp.ne.s32.totalorder %s96, %s97
      %p109 = scmp.eq.s32.totalorder %s19, 1
      %p110 = por %p108, %p109
      %p112 = scmp.ne.s32.totalorder %s97, %s111
      %p113 = scmp.eq.s32.totalorder %s19, 0
      %p114 = por %p112, %p113
      %s115 = ssub.s32 %s13, %s20
      %p116 = scmp.eq.s32.totalorder %s115, 0
      %s118 = sadd.s32 %s117, 1
      %s119 = scalar_select %p116, %s117, %s118
      %p122 = pneg %p116
      %p123 = scmp.eq.s32.totalorder %s13, 1
      %p124 = por %p122, %p123
      %p125 = scmp.ne.s32.totalorder %s117, %s120
      %p126 = scmp.eq.s32.totalorder %s13, 0
      %p127 = por %p125, %p126
      %p128 = scmp.ne.s32.totalorder %s117, %s120
      %p129 = scmp.eq.s32.totalorder %s18, 1
      %p130 = por %p128, %p129
      %p131 = scmp.ne.s32.totalorder %s120, %s121
      %p132 = scmp.eq.s32.totalorder %s18, 0
      %p133 = por %p131, %p132
      %p134 = scmp.ne.s32.totalorder %s120, %s121
      %p135 = scmp.eq.s32.totalorder %s19, 1
      %p136 = por %p134, %p135
      %p138 = scmp.ne.s32.totalorder %s121, %s137
      %p139 = scmp.eq.s32.totalorder %s19, 0
      %p140 = por %p138, %p139
      %p141 = scmp.le.s32.totalorder 1, %s13
      %p142 = scmp.lt.s32.totalorder %s13, 3
      %p143 = pnand %p141, %p142
      %p144 = pneg %p143
      // Predicated region
      $region9: #{multi_head_attention.5} parent=5 // pred_check
        _
      $region10: #{multi_head_attention.5} parent=5 // pred_check_branch
        %146 = sbr.rel (%p143) target = $region12
      $region11: #{multi_head_attention.5} parent=5 // pred_region
        %s147 = ssub.s32 %s13, 1
        // Predicated region
        $region13: #{multi_head_attention.5} parent=11 // pred_check
          %p148 = pneg %p86
        $region14: #{multi_head_attention.5} parent=11 // pred_check_branch
          %150 = sbr.rel (%p148) target = $region16
        $region15: #{multi_head_attention.5} parent=11 // pred_region
          _
        $region16: #{multi_head_attention.5} parent=11 // pred_fallthru
          _
        // Predicated region
        $region17: #{multi_head_attention.5} parent=11 // pred_check
          %p151 = pneg %p107
        $region18: #{multi_head_attention.5} parent=11 // pred_check_branch
          %153 = sbr.rel (%p151) target = $region20
        $region19: #{multi_head_attention.5} parent=11 // pred_region
          _
        $region20: #{multi_head_attention.5} parent=11 // pred_fallthru
          _
      $region12: #{multi_head_attention.5} parent=5 // pred_fallthru
        _
      %p154 = scmp.lt.s32.totalorder %s13, 2
      // Predicated region
      $region21: #{multi_head_attention.5} parent=5 // pred_check
        %p155 = pneg %p154
      $region22: #{multi_head_attention.5} parent=5 // pred_check_branch
        %157 = sbr.rel (%p155) target = $region24
      $region23: #{multi_head_attention.5} parent=5 // pred_region
        // Predicated region
        $region25: #{multi_head_attention.5} parent=23 // pred_check
          %p158 = pneg %p33
        $region26: #{multi_head_attention.5} parent=23 // pred_check_branch
          %160 = sbr.rel (%p158) target = $region28
        $region27: #{multi_head_attention.5} parent=23 // pred_region
          %s161 = smul.u32 2, %s13
          %p162 = scmp.lt.s32.totalorder %s161, 3
          %s163 = scalar_select %p162, %s161, 3
          %s164 = smul.addr %s163, 4
          %s165 = scalar_lea.vmem %s0, %s164
          %s166 = smul.u32 2, %s13
        $region28: #{multi_head_attention.5} parent=23 // pred_fallthru
          _
        // Predicated region
        $region29: #{multi_head_attention.5} parent=23 // pred_check
          %p167 = pneg %p59
        $region30: #{multi_head_attention.5} parent=23 // pred_check_branch
          %169 = sbr.rel (%p167) target = $region32
        $region31: #{multi_head_attention.5} parent=23 // pred_region
          %s170 = smul.u32 2, %s13
          %p171 = scmp.lt.s32.totalorder %s170, 3
          %s172 = scalar_select %p171, %s170, 3
          %s173 = smul.addr %s172, 8
          %s174 = scalar_lea.vmem %s1, %s173
          %s175 = smul.u32 2, %s13
        $region32: #{multi_head_attention.5} parent=23 // pred_fallthru
          _
      $region24: #{multi_head_attention.5} parent=5 // pred_fallthru
        _
      %p176 = scmp.le.s32.totalorder 1, %s13
      %p177 = scmp.lt.s32.totalorder %s13, 3
      %p178 = pnand %p176, %p177
      %p179 = pneg %p178
      // Predicated region
      $region33: #{multi_head_attention.5} parent=5 // pred_check
        _
      $region34: #{multi_head_attention.5} parent=5 // pred_check_branch
        %181 = sbr.rel (%p178) target = $region36
      $region35: #{multi_head_attention.5} parent=5 // pred_region
        %s182 = ssub.s32 %s13, 1
        %s183 = smul.u32 2, %s18
        %p184 = scmp.lt.s32.totalorder %s183, 3
        %s185 = scalar_select %p184, %s183, 3
        %s186 = smul.addr %s185, 4
        %s187 = scalar_lea.vmem %s0, %s186
        %p188 = pneg %p39
        %p189 = pneg %p36
        %s190 = smul.u32 2, %s18
        %p191 = scmp.lt.s32.totalorder %s190, 3
        %s192 = scalar_select %p191, %s190, 3
        %s193 = smul.addr %s192, 8
        %s194 = scalar_lea.vmem %s1, %s193
        %p195 = pneg %p65
        %p196 = pneg %p62
        %p197 = pneg %p86
        %p198 = pneg %p83
        %p199 = pneg %p107
        %p200 = pneg %p104
        %p201 = pneg %p133
        %p202 = pneg %p130
        %s203 = sand.u32 %s120, 1
        %s204 = scalar_lea.sflag [#allocation3], %s203
        %s205 = sand.u32 %s120, 1
        %s206 = smul.addr %s205, 16
        %s207 = scalar_lea.vmem [#allocation2], %s206
        %s208 = smul.u32 2, %s18
        %p209 = scmp.lt.s32.totalorder %s208, 3
        %s210 = scalar_select %p209, %s208, 3
        %s211 = smul.addr %s210, 4
        %s212 = scalar_lea.vmem %s0, %s211
        %s213 = smul.u32 2, %s18
        %s214 = smul.u32 2, %s18
        %p215 = scmp.lt.s32.totalorder %s214, 3
        %s216 = scalar_select %p215, %s214, 3
        %s217 = smul.addr %s216, 8
        %s218 = scalar_lea.vmem %s1, %s217
        %s219 = smul.u32 2, %s18
        %s220 = smul.u32 2, %s18
        %v222 = vld [vmem:[%s212] sm:$0xf]
        %v223 = vld [vmem:[%s212 + $0x4] sm:$0xf]
        %v224 = vld [vmem:[%s2] sm:$0xf]
        %v225 = vld [vmem:[%s2 + $0x4] sm:$0xf]
        %v226 = vld [vmem:[%s2 + $0x8] sm:$0xf]
        %v227 = vld [vmem:[%s2 + $0xc] sm:$0xf]
        %v228 = vld [vmem:[%s3] sm:$0x1]
        %v230 = vlaneseq
        %v231 = vshrl.u32 %v230, 7
        %v232 = vsub.s32 0, %v231
        %v233 = vrot.slane %v228, %v232
        %v237 = vunpack.c.l.b16 %v222
        %v238 = vunpack.c.l.b16 %v223
        %v239 = vpack.c.b16 %v238, %v237
        %v244 = vunpack.c.l.b16 %v224
        %v245 = vunpack.c.l.b16 %v225
        %v246 = vunpack.c.l.b16 %v226
        %v247 = vunpack.c.l.b16 %v227
        %v248 = vpack.c.b16 %v245, %v244
        %v249 = vpack.c.b16 %v247, %v246
        %vm252 = vcmask 261120
        %v254 = vsel %vm252, %v239, 0
        %256 = vmatprep.subr.bf16.mxu0 0
        %257 = vmatpush1.bf16.msra.mxu0 0
        %258 = vmatprep.subr.bf16.mxu0 0
        %259 = vmatpush1.bf16.msra.mxu0 0
        %260 = vmatprep.subr.bf16.mxu0 0
        %261 = vmatpush1.bf16.msra.mxu0 0
        %262 = vmatprep.subr.bf16.mxu0 0
        %263 = vmatpush1.bf16.msra.mxu0 0
        %264 = vmatprep.subr.bf16.mxu0 0
        %265 = vmatpush1.bf16.msra.mxu0 0
        %266 = vmatprep.subr.bf16.mxu0 0
        %267 = vmatpush1.bf16.msra.mxu0 0
        %268 = vmatprep.subr.bf16.mxu0 0
        %269 = vmatpush1.bf16.msra.mxu0 %v249
        %270 = vmatprep.subr.bf16.mxu0 0
        %271 = vmatpush1.bf16.msra.mxu0 %v248
        %272 = vmatprep.subr.bf16.mxu0 0
        %273 = vmatpush2.bf16.msra.mxu0 0
        %274 = vmatprep.subr.bf16.mxu0 0
        %275 = vmatpush2.bf16.msra.mxu0 0
        %276 = vmatprep.subr.bf16.mxu0 0
        %277 = vmatpush2.bf16.msra.mxu0 0
        %278 = vmatprep.subr.bf16.mxu0 0
        %279 = vmatpush2.bf16.msra.mxu0 0
        %280 = vmatprep.subr.bf16.mxu0 0
        %281 = vmatpush2.bf16.msra.mxu0 0
        %282 = vmatprep.subr.bf16.mxu0 0
        %283 = vmatpush2.bf16.msra.mxu0 0
        %284 = vmatprep.subr.bf16.mxu0 0
        %285 = vmatpush2.bf16.msra.mxu0 0
        %286 = vmatprep.subr.bf16.mxu0 0
        %287 = vmatpush2.bf16.msra.mxu0 0
        %288 = vmatprep.mubr.bf16.mxu0 0
        %289 = vmatmul.mubr.bf16.gmra.mxu0 %v254
        %v290 = vpop.f32.mrf.mxu0
        %v291 = vadd.f32 %v233, %v290
        %v292 = vpop.f32.mrf.mxu0
        %v293 = vpop.f32.mrf.mxu0
        %v294 = vadd.f32 %v233, %v293
        %v295 = vpop.f32.mrf.mxu0
        %296 = vdwg.mxu0
        %v297 = vld [vmem:[%s218] sm:$0xff]
        %v298 = vld [vmem:[%s218 + $0x8] sm:$0xff]
        %v299 = vadd.f32 %v297, %v291
        %v300 = vadd.f32 %v298, %v294
        %v301 = vsel %vm252, %v299, 0.0
        %302 = vadd.xlane.f32.xlu0 %v301
        %v303 = vpop.xlane.xlu0 %302
        %v304 = vsel %vm252, %v300, 0.0
        %305 = vadd.xlane.f32.xlu0 %v304
        %v306 = vpop.xlane.xlu0 %305
        %v307 = vrcp.pop 32.0
        %v308 = vmul.f32 %v303, %v307
        %v309 = vmul.f32 %v306, %v307
        %v310 = vsub.f32 %v299, %v308
        %v311 = vsub.f32 %v300, %v309
        %v312 = vmul.f32 %v310, %v310
        %v313 = vmul.f32 %v311, %v311
        %v314 = vsel %vm252, %v312, 0.0
        %315 = vadd.xlane.f32.xlu0 %v314
        %v316 = vpop.xlane.xlu0 %315
        %v317 = vsel %vm252, %v313, 0.0
        %318 = vadd.xlane.f32.xlu0 %v317
        %v319 = vpop.xlane.xlu0 %318
        %v320 = vmul.f32 %v316, %v307
        %v321 = vmul.f32 %v319, %v307
        %v322 = vadd.f32 %v320, 1e-06
        %v323 = vadd.f32 %v321, 1e-06
        %v324 = vrsqrt.pop %v322
        %v325 = vrsqrt.pop %v323
        %v326 = vmul.f32 %v310, %v324
        %v327 = vmul.f32 %v311, %v325
        %s328 = scalar_lea.vmem %s3, 1
        %v329 = vld [vmem:[%s328] sm:$0x1]
        %v331 = vlaneseq
        %v332 = vshrl.u32 %v331, 7
        %v333 = vsub.s32 0, %v332
        %v334 = vrot.slane %v329, %v333
        %v336 = vmul.f32 %v326, %v334
        %v337 = vmul.f32 %v327, %v334
        %s338 = scalar_lea.vmem %s3, 2
        %v339 = vld [vmem:[%s338] sm:$0x1]
        %v341 = vlaneseq
        %v342 = vshrl.u32 %v341, 7
        %v343 = vsub.s32 0, %v342
        %v344 = vrot.slane %v339, %v343
        %v346 = vadd.f32 %v336, %v344
        %v347 = vadd.f32 %v337, %v344
        %348 = vst.msk [vmem:[%s207] sm:$0xff] %vm252, %v346
        %349 = vst.msk [vmem:[%s207 + $0x8] sm:$0xff] %vm252, %v347
        %s350 = sand.u32 %s120, 1
        %s351 = scalar_lea.sflag [#allocation3], %s350
        %s352 = sand.u32 %s120, 1
        %s353 = smul.addr %s352, 16
        %s354 = scalar_lea.vmem [#allocation2], %s353
        // Predicated region
        $region37: #{multi_head_attention.5} parent=35 // pred_check
          %p355 = pneg %p130
        $region38: #{multi_head_attention.5} parent=35 // pred_check_branch
          %357 = sbr.rel (%p355) target = $region40
        $region39: #{multi_head_attention.5} parent=35 // pred_region
          %s358 = smul.u32 2, %s18
          %s360 = ssub.s32 256, 256
          %361 = vsyncadd %s351, %s360
          %s362 = smul.addr %s358, 128
          %s363 = scalar_lea.hbm %s4, %s362
          %s364 = sshll.u32 %s354, 4
          %s365 = int_to_ptr.vmem [resolvable:$true] %s364
          %370 = dma.vmem_to_hbm [thread:$0]  %s365, 256, %s363, %s351, 128, 128, 8
        $region40: #{multi_head_attention.5} parent=35 // pred_fallthru
          _
      $region36: #{multi_head_attention.5} parent=5 // pred_fallthru
        _
      %p371 = scmp.le.s32.totalorder 2, %s13
      // Predicated region
      $region41: #{multi_head_attention.5} parent=5 // pred_check
        %p372 = pneg %p371
      $region42: #{multi_head_attention.5} parent=5 // pred_check_branch
        %374 = sbr.rel (%p372) target = $region44
      $region43: #{multi_head_attention.5} parent=5 // pred_region
        %s375 = ssub.s32 %s13, 2
        // Predicated region
        $region45: #{multi_head_attention.5} parent=43 // pred_check
          %p376 = pneg %p136
        $region46: #{multi_head_attention.5} parent=43 // pred_check_branch
          %378 = sbr.rel (%p376) target = $region48
        $region47: #{multi_head_attention.5} parent=43 // pred_region
          %s379 = sand.u32 %s121, 1
          %s380 = scalar_lea.sflag [#allocation3], %s379
          %s381 = sand.u32 %s121, 1
          %s382 = smul.addr %s381, 16
          %s383 = scalar_lea.vmem [#allocation2], %s382
          %384 = dma.done %s380, 256
        $region48: #{multi_head_attention.5} parent=43 // pred_fallthru
          _
      $region44: #{multi_head_attention.5} parent=5 // pred_fallthru
        _
    $region6: #{multi_head_attention.5} parent=1 // loop_footer
      %s17 = sadd.s32 1, %s13
    $region7: #{multi_head_attention.5} parent=1 // loop_footer_branch
      %12 = sbr.rel target = $region3
    $region8: #{multi_head_attention.5} parent=1 // loop_exit
      _
    %385 = vsyncpa [#allocation3], 1
    %s386 = scalar_lea.sflag [#allocation3], 1
    %387 = vsyncpa %s386, 1

</llo_original>
